<compile_context>
chip_gen: v6e
topology: v6e:2x2x1
jax: 0.10.0
libtpu: 0.0.40
codegen_flags: <defaults>
</compile_context>

<pallas_src>
import jax
import jax.numpy as jnp
from jax import lax
from jax.experimental import pallas as pl
from jax.experimental.pallas import tpu as pltpu


def _gru_encoder_kernel(ids_ref, emb_ref, h0_ref, wih_ref, whh_ref,
                        bih_ref, bhh_ref, out_ref, xbuf, gibuf):
    """Whole-sequence GRU encoder in a single kernel invocation.

    ids_ref: (T,)    int32 token ids (SMEM, scalar prefetch)
    emb_ref: (V, H)  embedding table (VMEM-resident; small vocab)
    h0_ref:  (1, H)  initial hidden state
    wih_ref: (H, 3H) input->hidden weights, gate order [r|z|n]
    whh_ref: (H, 3H) hidden->hidden weights
    bih_ref: (1, 3H) input bias        bhh_ref: (1, 3H) hidden bias
    out_ref: (T, H)  per-step GRU outputs (== hidden states)
    xbuf:    (T, H)  VMEM scratch: gathered embeddings
    gibuf:   (T, 3H) VMEM scratch: batched input projections
    """
    T, H = out_ref.shape

    # Phase 1: gather the embedding row of every token into VMEM scratch.
    # TODO(synk): for large vocabularies keep the table in HBM and gather via
    # manual make_async_copy instead of a VMEM-resident table.
    for t in range(T):                                   # static, tiny trip count
        xbuf[pl.ds(t, 1), :] = emb_ref[pl.ds(ids_ref[t], 1), :]

    # Phase 2: batched input projection for all steps at once (one MXU pass
    # with T rows instead of T separate (1,H) matmuls on the recurrent path).
    gibuf[...] = (jnp.dot(xbuf[...], wih_ref[...],
                          preferred_element_type=jnp.float32) + bih_ref[...])

    # Phase 3: sequential recurrence — only h @ W_hh + gate math per step.
    def step(t, h):
        gi = gibuf[pl.ds(t, 1), :]                       # (1, 3H), precomputed
        gh = (jnp.dot(h, whh_ref[...],
                      preferred_element_type=jnp.float32) + bhh_ref[...])
        # H is a multiple of 128 -> lane-aligned gate slices (no masked selects).
        i_r, i_z, i_n = gi[:, 0:H], gi[:, H:2 * H], gi[:, 2 * H:3 * H]
        h_r, h_z, h_n = gh[:, 0:H], gh[:, H:2 * H], gh[:, 2 * H:3 * H]
        r = jax.nn.sigmoid(i_r + h_r)
        z = jax.nn.sigmoid(i_z + h_z)
        n = jnp.tanh(i_n + r * h_n)                      # PyTorch: r * (Wh h + b_hn)
        h_new = (1.0 - z) * n + z * h
        out_ref[pl.ds(t, 1), :] = h_new.astype(out_ref.dtype)
        return h_new

    lax.fori_loop(0, T, step, h0_ref[...].astype(jnp.float32), unroll=True)


@jax.jit
def encode_sequence(tokens, hidden0, params):
    """Run the EncoderRNN over a whole token sequence in one pallas_call.

    tokens:  (T,) int32 token ids.
    hidden0: (1, 1, H) f32 initial hidden state.
    Returns (outs, hidden_T): outs is (T, H) (out_t == hidden_t for a 1-layer
    GRU), hidden_T is (1, 1, H).
    """
    T = tokens.shape[0]
    V, H = params["embedding"].shape
    h0 = hidden0.reshape(1, H)

    grid_spec = pltpu.PrefetchScalarGridSpec(
        num_scalar_prefetch=1,
        grid=(1,),
        in_specs=[
            # Embedding table, weights, biases: constant index_map -> DMA'd
            # once, resident in VMEM for the whole sequence.
            pl.BlockSpec((V, H), lambda i, ids: (0, 0)),
            pl.BlockSpec((1, H), lambda i, ids: (0, 0)),
            pl.BlockSpec((H, 3 * H), lambda i, ids: (0, 0)),
            pl.BlockSpec((H, 3 * H), lambda i, ids: (0, 0)),
            pl.BlockSpec((1, 3 * H), lambda i, ids: (0, 0)),
            pl.BlockSpec((1, 3 * H), lambda i, ids: (0, 0)),
        ],
        # Whole (T, H) output slab stays in VMEM; single lane-dense writeback.
        out_specs=pl.BlockSpec((T, H), lambda i, ids: (0, 0)),
        scratch_shapes=[pltpu.VMEM((T, H), jnp.float32),
                        pltpu.VMEM((T, 3 * H), jnp.float32)],
    )

    outs = pl.pallas_call(
        _gru_encoder_kernel,
        out_shape=jax.ShapeDtypeStruct((T, H), jnp.float32),
        grid_spec=grid_spec,
        compiler_params=pltpu.CompilerParams(
            dimension_semantics=("arbitrary",)),
    )(tokens.astype(jnp.int32), params["embedding"], h0,
      params["w_ih_t"], params["w_hh_t"], params["b_ih"], params["b_hh"])

    hidden_T = outs[T - 1].reshape(1, 1, H)
    return outs, hidden_T


def encoder_rnn_forward(x_token, hidden, params):
    """Exact EncoderRNN.forward signature: one token -> (out, hidden), each (1,1,H)."""
    H = hidden.shape[-1]
    outs, hidden_new = encode_sequence(
        jnp.reshape(x_token, (1,)).astype(jnp.int32), hidden, params)
    return outs.reshape(1, 1, H), hidden_new


def init_params(key, vocab_size, hidden_size):
    """Deterministic synthetic parameters.

    GRU weights are stored PRE-TRANSPOSED as (H, 3H) (gate order [r|z|n]) so the
    forward pass never pays a per-call transpose copy; biases are (1, 3H).
    """
    k_emb, k_wih, k_whh, k_bih, k_bhh = jax.random.split(key, 5)
    scale = 1.0 / jnp.sqrt(hidden_size)
    return {
        "embedding": jax.random.normal(k_emb, (vocab_size, hidden_size),
                                       jnp.float32),
        "w_ih_t": jax.random.uniform(k_wih, (hidden_size, 3 * hidden_size),
                                     jnp.float32, -scale, scale),
        "w_hh_t": jax.random.uniform(k_whh, (hidden_size, 3 * hidden_size),
                                     jnp.float32, -scale, scale),
        "b_ih": jax.random.uniform(k_bih, (1, 3 * hidden_size),
                                   jnp.float32, -scale, scale),
        "b_hh": jax.random.uniform(k_bhh, (1, 3 * hidden_size),
                                   jnp.float32, -scale, scale),
    }


def _reference_step(x_row, h, params, H):
    gi = x_row @ params["w_ih_t"] + params["b_ih"]
    gh = h @ params["w_hh_t"] + params["b_hh"]
    i_r, i_z, i_n = gi[:, :H], gi[:, H:2 * H], gi[:, 2 * H:]
    h_r, h_z, h_n = gh[:, :H], gh[:, H:2 * H], gh[:, 2 * H:]
    r = jax.nn.sigmoid(i_r + h_r)
    z = jax.nn.sigmoid(i_z + h_z)
    n = jnp.tanh(i_n + r * h_n)
    return (1.0 - z) * n + z * h


def _reference_sequence(tokens, hidden0, params):
    """Pure-JAX reference: iteratively apply the torch.nn.GRU single-step math."""
    H = hidden0.shape[-1]
    h = hidden0.reshape(1, H)
    outs = []
    for t in range(tokens.shape[0]):
        x = jnp.take(params["embedding"], tokens[t], axis=0).reshape(1, H)
        h = _reference_step(x, h, params, H)
        outs.append(h)
    return jnp.concatenate(outs, axis=0), h.reshape(1, 1, H)


if __name__ == "__main__":
    VOCAB = 50
    HIDDEN = 128   # multiple of 128 -> lane-aligned gates and unmasked stores
    SEQ = 8

    key = jax.random.PRNGKey(0)
    k_params, k_tok, k_hid = jax.random.split(key, 3)

    params = init_params(k_params, VOCAB, HIDDEN)
    tokens = jax.random.randint(k_tok, (SEQ,), 0, VOCAB, jnp.int32)
    hidden0 = jax.random.normal(k_hid, (1, 1, HIDDEN), jnp.float32)

    # Fused whole-sequence encoder (one pallas_call, one grid step).
    outs, hidden_T = encode_sequence(tokens, hidden0, params)
    jax.block_until_ready((outs, hidden_T))

    ref_outs, ref_hidden_T = _reference_sequence(tokens, hidden0, params)
    assert outs.shape == (SEQ, HIDDEN)
    assert hidden_T.shape == (1, 1, HIDDEN)
    assert jnp.allclose(outs, ref_outs, atol=1e-5, rtol=1e-5)
    assert jnp.allclose(hidden_T, ref_hidden_T, atol=1e-5, rtol=1e-5)

    # Module-signature path (single token), matching EncoderRNN.forward shapes.
    out1, hidden1 = encoder_rnn_forward(tokens[0], hidden0, params)
    jax.block_until_ready((out1, hidden1))
    assert out1.shape == (1, 1, HIDDEN) and hidden1.shape == (1, 1, HIDDEN)
    assert jnp.allclose(out1.reshape(1, HIDDEN), ref_outs[0:1], atol=1e-5, rtol=1e-5)
    assert jnp.allclose(out1, hidden1)

    print("KERNEL_OK")
</pallas_src>

<mosaic_0001>
module attributes {stable_mosaic.version = 11 : i64} {
  func.func @_gru_encoder_kernel(%arg0: i32, %arg1: memref<8xi32, #tpu.memory_space<smem>>, %arg2: memref<50x128xf32, #tpu.memory_space<vmem>>, %arg3: memref<1x128xf32, #tpu.memory_space<vmem>>, %arg4: memref<128x384xf32, #tpu.memory_space<vmem>>, %arg5: memref<128x384xf32, #tpu.memory_space<vmem>>, %arg6: memref<1x384xf32, #tpu.memory_space<vmem>>, %arg7: memref<1x384xf32, #tpu.memory_space<vmem>>, %arg8: memref<8x128xf32, #tpu.memory_space<vmem>>, %arg9: memref<8x128xf32, #tpu.memory_space<vmem>>, %arg10: memref<8x384xf32, #tpu.memory_space<vmem>>) attributes {dimension_semantics = [#tpu.dimension_semantics<arbitrary>], iteration_bounds = array<i64: 1>, scalar_prefetch = 1 : i64, scratch_operands = 2 : i64, tpu.core_type = #tpu.core_type<tc>, window_params = [{pipeline_mode = #tpu.pipeline_mode<synchronous>, transform_indices = @transform_0, window_bounds = array<i64: 50, 128>}, {pipeline_mode = #tpu.pipeline_mode<synchronous>, transform_indices = @transform_1, window_bounds = array<i64: 1, 128>}, {pipeline_mode = #tpu.pipeline_mode<synchronous>, transform_indices = @transform_2, window_bounds = array<i64: 128, 384>}, {pipeline_mode = #tpu.pipeline_mode<synchronous>, transform_indices = @transform_3, window_bounds = array<i64: 128, 384>}, {pipeline_mode = #tpu.pipeline_mode<synchronous>, transform_indices = @transform_4, window_bounds = array<i64: 1, 384>}, {pipeline_mode = #tpu.pipeline_mode<synchronous>, transform_indices = @transform_5, window_bounds = array<i64: 1, 384>}, {pipeline_mode = #tpu.pipeline_mode<synchronous>, transform_indices = @transform_6, window_bounds = array<i64: 8, 128>}]} {
    %c0 = arith.constant 0 : index
    %0 = memref.load %arg1[%c0] : memref<8xi32, #tpu.memory_space<smem>>
    %1 = arith.index_cast %0 : i32 to index
    %c0_0 = arith.constant 0 : index
    %2 = vector.load %arg2[%1, %c0_0] : memref<50x128xf32, #tpu.memory_space<vmem>>, vector<1x128xf32>
    %c0_1 = arith.constant 0 : index
    %c0_2 = arith.constant 0 : index
    %3 = vector.load %arg9[%c0_1, %c0_2] : memref<8x128xf32, #tpu.memory_space<vmem>>, vector<1x128xf32>
    tpu.vector_store %arg9[%c0_1, %c0_2], %2 {strides = array<i32>} : memref<8x128xf32, #tpu.memory_space<vmem>>, vector<1x128xf32>,
    %c1 = arith.constant 1 : index
    %4 = memref.load %arg1[%c1] : memref<8xi32, #tpu.memory_space<smem>>
    %5 = arith.index_cast %4 : i32 to index
    %c0_3 = arith.constant 0 : index
    %6 = vector.load %arg2[%5, %c0_3] : memref<50x128xf32, #tpu.memory_space<vmem>>, vector<1x128xf32>
    %c1_4 = arith.constant 1 : index
    %c0_5 = arith.constant 0 : index
    %7 = vector.load %arg9[%c1_4, %c0_5] : memref<8x128xf32, #tpu.memory_space<vmem>>, vector<1x128xf32>
    tpu.vector_store %arg9[%c1_4, %c0_5], %6 {strides = array<i32>} : memref<8x128xf32, #tpu.memory_space<vmem>>, vector<1x128xf32>,
    %c2 = arith.constant 2 : index
    %8 = memref.load %arg1[%c2] : memref<8xi32, #tpu.memory_space<smem>>
    %9 = arith.index_cast %8 : i32 to index
    %c0_6 = arith.constant 0 : index
    %10 = vector.load %arg2[%9, %c0_6] : memref<50x128xf32, #tpu.memory_space<vmem>>, vector<1x128xf32>
    %c2_7 = arith.constant 2 : index
    %c0_8 = arith.constant 0 : index
    %11 = vector.load %arg9[%c2_7, %c0_8] : memref<8x128xf32, #tpu.memory_space<vmem>>, vector<1x128xf32>
    tpu.vector_store %arg9[%c2_7, %c0_8], %10 {strides = array<i32>} : memref<8x128xf32, #tpu.memory_space<vmem>>, vector<1x128xf32>,
    %c3 = arith.constant 3 : index
    %12 = memref.load %arg1[%c3] : memref<8xi32, #tpu.memory_space<smem>>
    %13 = arith.index_cast %12 : i32 to index
    %c0_9 = arith.constant 0 : index
    %14 = vector.load %arg2[%13, %c0_9] : memref<50x128xf32, #tpu.memory_space<vmem>>, vector<1x128xf32>
    %c3_10 = arith.constant 3 : index
    %c0_11 = arith.constant 0 : index
    %15 = vector.load %arg9[%c3_10, %c0_11] : memref<8x128xf32, #tpu.memory_space<vmem>>, vector<1x128xf32>
    tpu.vector_store %arg9[%c3_10, %c0_11], %14 {strides = array<i32>} : memref<8x128xf32, #tpu.memory_space<vmem>>, vector<1x128xf32>,
    %c4 = arith.constant 4 : index
    %16 = memref.load %arg1[%c4] : memref<8xi32, #tpu.memory_space<smem>>
    %17 = arith.index_cast %16 : i32 to index
    %c0_12 = arith.constant 0 : index
    %18 = vector.load %arg2[%17, %c0_12] : memref<50x128xf32, #tpu.memory_space<vmem>>, vector<1x128xf32>
    %c4_13 = arith.constant 4 : index
    %c0_14 = arith.constant 0 : index
    %19 = vector.load %arg9[%c4_13, %c0_14] : memref<8x128xf32, #tpu.memory_space<vmem>>, vector<1x128xf32>
    tpu.vector_store %arg9[%c4_13, %c0_14], %18 {strides = array<i32>} : memref<8x128xf32, #tpu.memory_space<vmem>>, vector<1x128xf32>,
    %c5 = arith.constant 5 : index
    %20 = memref.load %arg1[%c5] : memref<8xi32, #tpu.memory_space<smem>>
    %21 = arith.index_cast %20 : i32 to index
    %c0_15 = arith.constant 0 : index
    %22 = vector.load %arg2[%21, %c0_15] : memref<50x128xf32, #tpu.memory_space<vmem>>, vector<1x128xf32>
    %c5_16 = arith.constant 5 : index
    %c0_17 = arith.constant 0 : index
    %23 = vector.load %arg9[%c5_16, %c0_17] : memref<8x128xf32, #tpu.memory_space<vmem>>, vector<1x128xf32>
    tpu.vector_store %arg9[%c5_16, %c0_17], %22 {strides = array<i32>} : memref<8x128xf32, #tpu.memory_space<vmem>>, vector<1x128xf32>,
    %c6 = arith.constant 6 : index
    %24 = memref.load %arg1[%c6] : memref<8xi32, #tpu.memory_space<smem>>
    %25 = arith.index_cast %24 : i32 to index
    %c0_18 = arith.constant 0 : index
    %26 = vector.load %arg2[%25, %c0_18] : memref<50x128xf32, #tpu.memory_space<vmem>>, vector<1x128xf32>
    %c6_19 = arith.constant 6 : index
    %c0_20 = arith.constant 0 : index
    %27 = vector.load %arg9[%c6_19, %c0_20] : memref<8x128xf32, #tpu.memory_space<vmem>>, vector<1x128xf32>
    tpu.vector_store %arg9[%c6_19, %c0_20], %26 {strides = array<i32>} : memref<8x128xf32, #tpu.memory_space<vmem>>, vector<1x128xf32>,
    %c7 = arith.constant 7 : index
    %28 = memref.load %arg1[%c7] : memref<8xi32, #tpu.memory_space<smem>>
    %29 = arith.index_cast %28 : i32 to index
    %c0_21 = arith.constant 0 : index
    %30 = vector.load %arg2[%29, %c0_21] : memref<50x128xf32, #tpu.memory_space<vmem>>, vector<1x128xf32>
    %c7_22 = arith.constant 7 : index
    %c0_23 = arith.constant 0 : index
    %31 = vector.load %arg9[%c7_22, %c0_23] : memref<8x128xf32, #tpu.memory_space<vmem>>, vector<1x128xf32>
    tpu.vector_store %arg9[%c7_22, %c0_23], %30 {strides = array<i32>} : memref<8x128xf32, #tpu.memory_space<vmem>>, vector<1x128xf32>,
    %c0_24 = arith.constant 0 : index
    %c0_25 = arith.constant 0 : index
    %32 = vector.load %arg9[%c0_24, %c0_25] : memref<8x128xf32, #tpu.memory_space<vmem>>, vector<8x128xf32>
    %c0_26 = arith.constant 0 : index
    %c0_27 = arith.constant 0 : index
    %33 = vector.load %arg4[%c0_26, %c0_27] : memref<128x384xf32, #tpu.memory_space<vmem>>, vector<128x384xf32>
    %cst = arith.constant dense<0.000000e+00> : vector<8x384xf32>
    %34 = tpu.matmul %32, %33, %cst {dimension_numbers = #tpu.dot_dimension_numbers<[1], [0], [0], [1], [0, 0, 1, 1], [], []>} : vector<8x128xf32>, vector<128x384xf32>, vector<8x384xf32> -> vector<8x384xf32>
    %c0_28 = arith.constant 0 : index
    %c0_29 = arith.constant 0 : index
    %35 = vector.load %arg6[%c0_28, %c0_29] : memref<1x384xf32, #tpu.memory_space<vmem>>, vector<1x384xf32>
    %36 = vector.broadcast %35 : vector<1x384xf32> to vector<8x384xf32>
    %37 = arith.addf %34, %36 : vector<8x384xf32>
    %c0_30 = arith.constant 0 : index
    %c0_31 = arith.constant 0 : index
    %38 = vector.load %arg10[%c0_30, %c0_31] : memref<8x384xf32, #tpu.memory_space<vmem>>, vector<8x384xf32>
    tpu.vector_store %arg10[%c0_30, %c0_31], %37 {strides = array<i32>} : memref<8x384xf32, #tpu.memory_space<vmem>>, vector<8x384xf32>,
    %c0_32 = arith.constant 0 : index
    %c0_33 = arith.constant 0 : index
    %39 = vector.load %arg3[%c0_32, %c0_33] : memref<1x128xf32, #tpu.memory_space<vmem>>, vector<1x128xf32>
    %c0_i32 = arith.constant 0 : i32
    %40 = arith.index_cast %c0_i32 : i32 to index
    %c0_34 = arith.constant 0 : index
    %41 = vector.load %arg10[%40, %c0_34] : memref<8x384xf32, #tpu.memory_space<vmem>>, vector<1x384xf32>
    %c0_35 = arith.constant 0 : index
    %c0_36 = arith.constant 0 : index
    %42 = vector.load %arg5[%c0_35, %c0_36] : memref<128x384xf32, #tpu.memory_space<vmem>>, vector<128x384xf32>
    %cst_37 = arith.constant dense<0.000000e+00> : vector<1x384xf32>
    %43 = tpu.matmul %39, %42, %cst_37 {dimension_numbers = #tpu.dot_dimension_numbers<[1], [0], [0], [1], [0, 0, 1, 1], [], []>} : vector<1x128xf32>, vector<128x384xf32>, vector<1x384xf32> -> vector<1x384xf32>
    %c0_38 = arith.constant 0 : index
    %c0_39 = arith.constant 0 : index
    %44 = vector.load %arg7[%c0_38, %c0_39] : memref<1x384xf32, #tpu.memory_space<vmem>>, vector<1x384xf32>
    %45 = arith.addf %43, %44 : vector<1x384xf32>
    %46 = vector.extract_strided_slice %41 {offsets = [0, 0], sizes = [1, 128], strides = [1, 1]} : vector<1x384xf32> to vector<1x128xf32>
    %47 = vector.extract_strided_slice %41 {offsets = [0, 128], sizes = [1, 128], strides = [1, 1]} : vector<1x384xf32> to vector<1x128xf32>
    %48 = vector.extract_strided_slice %41 {offsets = [0, 256], sizes = [1, 128], strides = [1, 1]} : vector<1x384xf32> to vector<1x128xf32>
    %49 = vector.extract_strided_slice %45 {offsets = [0, 0], sizes = [1, 128], strides = [1, 1]} : vector<1x384xf32> to vector<1x128xf32>
    %50 = vector.extract_strided_slice %45 {offsets = [0, 128], sizes = [1, 128], strides = [1, 1]} : vector<1x384xf32> to vector<1x128xf32>
    %51 = vector.extract_strided_slice %45 {offsets = [0, 256], sizes = [1, 128], strides = [1, 1]} : vector<1x384xf32> to vector<1x128xf32>
    %52 = arith.addf %46, %49 : vector<1x128xf32>
    %53 = arith.negf %52 : vector<1x128xf32>
    %54 = math.exp %53 : vector<1x128xf32>
    %cst_40 = arith.constant 1.000000e+00 : f32
    %55 = vector.broadcast %cst_40 : f32 to vector<1x128xf32>
    %56 = arith.addf %55, %54 : vector<1x128xf32>
    %57 = arith.divf %55, %56 : vector<1x128xf32>
    %58 = arith.addf %47, %50 : vector<1x128xf32>
    %59 = arith.negf %58 : vector<1x128xf32>
    %60 = math.exp %59 : vector<1x128xf32>
    %cst_41 = arith.constant 1.000000e+00 : f32
    %61 = vector.broadcast %cst_41 : f32 to vector<1x128xf32>
    %62 = arith.addf %61, %60 : vector<1x128xf32>
    %63 = arith.divf %61, %62 : vector<1x128xf32>
    %64 = arith.mulf %57, %51 : vector<1x128xf32>
    %65 = arith.addf %48, %64 : vector<1x128xf32>
    %66 = math.tanh %65 : vector<1x128xf32>
    %cst_42 = arith.constant 1.000000e+00 : f32
    %67 = vector.broadcast %cst_42 : f32 to vector<1x128xf32>
    %68 = arith.subf %67, %63 : vector<1x128xf32>
    %69 = arith.mulf %68, %66 : vector<1x128xf32>
    %70 = arith.mulf %63, %39 : vector<1x128xf32>
    %71 = arith.addf %69, %70 : vector<1x128xf32>
    %72 = arith.index_cast %c0_i32 : i32 to index
    %c0_43 = arith.constant 0 : index
    %73 = vector.load %arg8[%72, %c0_43] : memref<8x128xf32, #tpu.memory_space<vmem>>, vector<1x128xf32>
    tpu.vector_store %arg8[%72, %c0_43], %71 {strides = array<i32>} : memref<8x128xf32, #tpu.memory_space<vmem>>, vector<1x128xf32>,
    %c1_i32 = arith.constant 1 : i32
    %74 = arith.index_cast %c1_i32 : i32 to index
    %c0_44 = arith.constant 0 : index
    %75 = vector.load %arg10[%74, %c0_44] : memref<8x384xf32, #tpu.memory_space<vmem>>, vector<1x384xf32>
    %c0_45 = arith.constant 0 : index
    %c0_46 = arith.constant 0 : index
    %76 = vector.load %arg5[%c0_45, %c0_46] : memref<128x384xf32, #tpu.memory_space<vmem>>, vector<128x384xf32>
    %cst_47 = arith.constant dense<0.000000e+00> : vector<1x384xf32>
    %77 = tpu.matmul %71, %76, %cst_47 {dimension_numbers = #tpu.dot_dimension_numbers<[1], [0], [0], [1], [0, 0, 1, 1], [], []>} : vector<1x128xf32>, vector<128x384xf32>, vector<1x384xf32> -> vector<1x384xf32>
    %c0_48 = arith.constant 0 : index
    %c0_49 = arith.constant 0 : index
    %78 = vector.load %arg7[%c0_48, %c0_49] : memref<1x384xf32, #tpu.memory_space<vmem>>, vector<1x384xf32>
    %79 = arith.addf %77, %78 : vector<1x384xf32>
    %80 = vector.extract_strided_slice %75 {offsets = [0, 0], sizes = [1, 128], strides = [1, 1]} : vector<1x384xf32> to vector<1x128xf32>
    %81 = vector.extract_strided_slice %75 {offsets = [0, 128], sizes = [1, 128], strides = [1, 1]} : vector<1x384xf32> to vector<1x128xf32>
    %82 = vector.extract_strided_slice %75 {offsets = [0, 256], sizes = [1, 128], strides = [1, 1]} : vector<1x384xf32> to vector<1x128xf32>
    %83 = vector.extract_strided_slice %79 {offsets = [0, 0], sizes = [1, 128], strides = [1, 1]} : vector<1x384xf32> to vector<1x128xf32>
    %84 = vector.extract_strided_slice %79 {offsets = [0, 128], sizes = [1, 128], strides = [1, 1]} : vector<1x384xf32> to vector<1x128xf32>
    %85 = vector.extract_strided_slice %79 {offsets = [0, 256], sizes = [1, 128], strides = [1, 1]} : vector<1x384xf32> to vector<1x128xf32>
    %86 = arith.addf %80, %83 : vector<1x128xf32>
    %87 = arith.negf %86 : vector<1x128xf32>
    %88 = math.exp %87 : vector<1x128xf32>
    %cst_50 = arith.constant 1.000000e+00 : f32
    %89 = vector.broadcast %cst_50 : f32 to vector<1x128xf32>
    %90 = arith.addf %89, %88 : vector<1x128xf32>
    %91 = arith.divf %89, %90 : vector<1x128xf32>
    %92 = arith.addf %81, %84 : vector<1x128xf32>
    %93 = arith.negf %92 : vector<1x128xf32>
    %94 = math.exp %93 : vector<1x128xf32>
    %cst_51 = arith.constant 1.000000e+00 : f32
    %95 = vector.broadcast %cst_51 : f32 to vector<1x128xf32>
    %96 = arith.addf %95, %94 : vector<1x128xf32>
    %97 = arith.divf %95, %96 : vector<1x128xf32>
    %98 = arith.mulf %91, %85 : vector<1x128xf32>
    %99 = arith.addf %82, %98 : vector<1x128xf32>
    %100 = math.tanh %99 : vector<1x128xf32>
    %cst_52 = arith.constant 1.000000e+00 : f32
    %101 = vector.broadcast %cst_52 : f32 to vector<1x128xf32>
    %102 = arith.subf %101, %97 : vector<1x128xf32>
    %103 = arith.mulf %102, %100 : vector<1x128xf32>
    %104 = arith.mulf %97, %71 : vector<1x128xf32>
    %105 = arith.addf %103, %104 : vector<1x128xf32>
    %106 = arith.index_cast %c1_i32 : i32 to index
    %c0_53 = arith.constant 0 : index
    %107 = vector.load %arg8[%106, %c0_53] : memref<8x128xf32, #tpu.memory_space<vmem>>, vector<1x128xf32>
    tpu.vector_store %arg8[%106, %c0_53], %105 {strides = array<i32>} : memref<8x128xf32, #tpu.memory_space<vmem>>, vector<1x128xf32>,
    %c2_i32 = arith.constant 2 : i32
    %108 = arith.index_cast %c2_i32 : i32 to index
    %c0_54 = arith.constant 0 : index
    %109 = vector.load %arg10[%108, %c0_54] : memref<8x384xf32, #tpu.memory_space<vmem>>, vector<1x384xf32>
    %c0_55 = arith.constant 0 : index
    %c0_56 = arith.constant 0 : index
    %110 = vector.load %arg5[%c0_55, %c0_56] : memref<128x384xf32, #tpu.memory_space<vmem>>, vector<128x384xf32>
    %cst_57 = arith.constant dense<0.000000e+00> : vector<1x384xf32>
    %111 = tpu.matmul %105, %110, %cst_57 {dimension_numbers = #tpu.dot_dimension_numbers<[1], [0], [0], [1], [0, 0, 1, 1], [], []>} : vector<1x128xf32>, vector<128x384xf32>, vector<1x384xf32> -> vector<1x384xf32>
    %c0_58 = arith.constant 0 : index
    %c0_59 = arith.constant 0 : index
    %112 = vector.load %arg7[%c0_58, %c0_59] : memref<1x384xf32, #tpu.memory_space<vmem>>, vector<1x384xf32>
    %113 = arith.addf %111, %112 : vector<1x384xf32>
    %114 = vector.extract_strided_slice %109 {offsets = [0, 0], sizes = [1, 128], strides = [1, 1]} : vector<1x384xf32> to vector<1x128xf32>
    %115 = vector.extract_strided_slice %109 {offsets = [0, 128], sizes = [1, 128], strides = [1, 1]} : vector<1x384xf32> to vector<1x128xf32>
    %116 = vector.extract_strided_slice %109 {offsets = [0, 256], sizes = [1, 128], strides = [1, 1]} : vector<1x384xf32> to vector<1x128xf32>
    %117 = vector.extract_strided_slice %113 {offsets = [0, 0], sizes = [1, 128], strides = [1, 1]} : vector<1x384xf32> to vector<1x128xf32>
    %118 = vector.extract_strided_slice %113 {offsets = [0, 128], sizes = [1, 128], strides = [1, 1]} : vector<1x384xf32> to vector<1x128xf32>
    %119 = vector.extract_strided_slice %113 {offsets = [0, 256], sizes = [1, 128], strides = [1, 1]} : vector<1x384xf32> to vector<1x128xf32>
    %120 = arith.addf %114, %117 : vector<1x128xf32>
    %121 = arith.negf %120 : vector<1x128xf32>
    %122 = math.exp %121 : vector<1x128xf32>
    %cst_60 = arith.constant 1.000000e+00 : f32
    %123 = vector.broadcast %cst_60 : f32 to vector<1x128xf32>
    %124 = arith.addf %123, %122 : vector<1x128xf32>
    %125 = arith.divf %123, %124 : vector<1x128xf32>
    %126 = arith.addf %115, %118 : vector<1x128xf32>
    %127 = arith.negf %126 : vector<1x128xf32>
    %128 = math.exp %127 : vector<1x128xf32>
    %cst_61 = arith.constant 1.000000e+00 : f32
    %129 = vector.broadcast %cst_61 : f32 to vector<1x128xf32>
    %130 = arith.addf %129, %128 : vector<1x128xf32>
    %131 = arith.divf %129, %130 : vector<1x128xf32>
    %132 = arith.mulf %125, %119 : vector<1x128xf32>
    %133 = arith.addf %116, %132 : vector<1x128xf32>
    %134 = math.tanh %133 : vector<1x128xf32>
    %cst_62 = arith.constant 1.000000e+00 : f32
    %135 = vector.broadcast %cst_62 : f32 to vector<1x128xf32>
    %136 = arith.subf %135, %131 : vector<1x128xf32>
    %137 = arith.mulf %136, %134 : vector<1x128xf32>
    %138 = arith.mulf %131, %105 : vector<1x128xf32>
    %139 = arith.addf %137, %138 : vector<1x128xf32>
    %140 = arith.index_cast %c2_i32 : i32 to index
    %c0_63 = arith.constant 0 : index
    %141 = vector.load %arg8[%140, %c0_63] : memref<8x128xf32, #tpu.memory_space<vmem>>, vector<1x128xf32>
    tpu.vector_store %arg8[%140, %c0_63], %139 {strides = array<i32>} : memref<8x128xf32, #tpu.memory_space<vmem>>, vector<1x128xf32>,
    %c3_i32 = arith.constant 3 : i32
    %142 = arith.index_cast %c3_i32 : i32 to index
    %c0_64 = arith.constant 0 : index
    %143 = vector.load %arg10[%142, %c0_64] : memref<8x384xf32, #tpu.memory_space<vmem>>, vector<1x384xf32>
    %c0_65 = arith.constant 0 : index
    %c0_66 = arith.constant 0 : index
    %144 = vector.load %arg5[%c0_65, %c0_66] : memref<128x384xf32, #tpu.memory_space<vmem>>, vector<128x384xf32>
    %cst_67 = arith.constant dense<0.000000e+00> : vector<1x384xf32>
    %145 = tpu.matmul %139, %144, %cst_67 {dimension_numbers = #tpu.dot_dimension_numbers<[1], [0], [0], [1], [0, 0, 1, 1], [], []>} : vector<1x128xf32>, vector<128x384xf32>, vector<1x384xf32> -> vector<1x384xf32>
    %c0_68 = arith.constant 0 : index
    %c0_69 = arith.constant 0 : index
    %146 = vector.load %arg7[%c0_68, %c0_69] : memref<1x384xf32, #tpu.memory_space<vmem>>, vector<1x384xf32>
    %147 = arith.addf %145, %146 : vector<1x384xf32>
    %148 = vector.extract_strided_slice %143 {offsets = [0, 0], sizes = [1, 128], strides = [1, 1]} : vector<1x384xf32> to vector<1x128xf32>
    %149 = vector.extract_strided_slice %143 {offsets = [0, 128], sizes = [1, 128], strides = [1, 1]} : vector<1x384xf32> to vector<1x128xf32>
    %150 = vector.extract_strided_slice %143 {offsets = [0, 256], sizes = [1, 128], strides = [1, 1]} : vector<1x384xf32> to vector<1x128xf32>
    %151 = vector.extract_strided_slice %147 {offsets = [0, 0], sizes = [1, 128], strides = [1, 1]} : vector<1x384xf32> to vector<1x128xf32>
    %152 = vector.extract_strided_slice %147 {offsets = [0, 128], sizes = [1, 128], strides = [1, 1]} : vector<1x384xf32> to vector<1x128xf32>
    %153 = vector.extract_strided_slice %147 {offsets = [0, 256], sizes = [1, 128], strides = [1, 1]} : vector<1x384xf32> to vector<1x128xf32>
    %154 = arith.addf %148, %151 : vector<1x128xf32>
    %155 = arith.negf %154 : vector<1x128xf32>
    %156 = math.exp %155 : vector<1x128xf32>
    %cst_70 = arith.constant 1.000000e+00 : f32
    %157 = vector.broadcast %cst_70 : f32 to vector<1x128xf32>
    %158 = arith.addf %157, %156 : vector<1x128xf32>
    %159 = arith.divf %157, %158 : vector<1x128xf32>
    %160 = arith.addf %149, %152 : vector<1x128xf32>
    %161 = arith.negf %160 : vector<1x128xf32>
    %162 = math.exp %161 : vector<1x128xf32>
    %cst_71 = arith.constant 1.000000e+00 : f32
    %163 = vector.broadcast %cst_71 : f32 to vector<1x128xf32>
    %164 = arith.addf %163, %162 : vector<1x128xf32>
    %165 = arith.divf %163, %164 : vector<1x128xf32>
    %166 = arith.mulf %159, %153 : vector<1x128xf32>
    %167 = arith.addf %150, %166 : vector<1x128xf32>
    %168 = math.tanh %167 : vector<1x128xf32>
    %cst_72 = arith.constant 1.000000e+00 : f32
    %169 = vector.broadcast %cst_72 : f32 to vector<1x128xf32>
    %170 = arith.subf %169, %165 : vector<1x128xf32>
    %171 = arith.mulf %170, %168 : vector<1x128xf32>
    %172 = arith.mulf %165, %139 : vector<1x128xf32>
    %173 = arith.addf %171, %172 : vector<1x128xf32>
    %174 = arith.index_cast %c3_i32 : i32 to index
    %c0_73 = arith.constant 0 : index
    %175 = vector.load %arg8[%174, %c0_73] : memref<8x128xf32, #tpu.memory_space<vmem>>, vector<1x128xf32>
    tpu.vector_store %arg8[%174, %c0_73], %173 {strides = array<i32>} : memref<8x128xf32, #tpu.memory_space<vmem>>, vector<1x128xf32>,
    %c4_i32 = arith.constant 4 : i32
    %176 = arith.index_cast %c4_i32 : i32 to index
    %c0_74 = arith.constant 0 : index
    %177 = vector.load %arg10[%176, %c0_74] : memref<8x384xf32, #tpu.memory_space<vmem>>, vector<1x384xf32>
    %c0_75 = arith.constant 0 : index
    %c0_76 = arith.constant 0 : index
    %178 = vector.load %arg5[%c0_75, %c0_76] : memref<128x384xf32, #tpu.memory_space<vmem>>, vector<128x384xf32>
    %cst_77 = arith.constant dense<0.000000e+00> : vector<1x384xf32>
    %179 = tpu.matmul %173, %178, %cst_77 {dimension_numbers = #tpu.dot_dimension_numbers<[1], [0], [0], [1], [0, 0, 1, 1], [], []>} : vector<1x128xf32>, vector<128x384xf32>, vector<1x384xf32> -> vector<1x384xf32>
    %c0_78 = arith.constant 0 : index
    %c0_79 = arith.constant 0 : index
    %180 = vector.load %arg7[%c0_78, %c0_79] : memref<1x384xf32, #tpu.memory_space<vmem>>, vector<1x384xf32>
    %181 = arith.addf %179, %180 : vector<1x384xf32>
    %182 = vector.extract_strided_slice %177 {offsets = [0, 0], sizes = [1, 128], strides = [1, 1]} : vector<1x384xf32> to vector<1x128xf32>
    %183 = vector.extract_strided_slice %177 {offsets = [0, 128], sizes = [1, 128], strides = [1, 1]} : vector<1x384xf32> to vector<1x128xf32>
    %184 = vector.extract_strided_slice %177 {offsets = [0, 256], sizes = [1, 128], strides = [1, 1]} : vector<1x384xf32> to vector<1x128xf32>
    %185 = vector.extract_strided_slice %181 {offsets = [0, 0], sizes = [1, 128], strides = [1, 1]} : vector<1x384xf32> to vector<1x128xf32>
    %186 = vector.extract_strided_slice %181 {offsets = [0, 128], sizes = [1, 128], strides = [1, 1]} : vector<1x384xf32> to vector<1x128xf32>
    %187 = vector.extract_strided_slice %181 {offsets = [0, 256], sizes = [1, 128], strides = [1, 1]} : vector<1x384xf32> to vector<1x128xf32>
    %188 = arith.addf %182, %185 : vector<1x128xf32>
    %189 = arith.negf %188 : vector<1x128xf32>
    %190 = math.exp %189 : vector<1x128xf32>
    %cst_80 = arith.constant 1.000000e+00 : f32
    %191 = vector.broadcast %cst_80 : f32 to vector<1x128xf32>
    %192 = arith.addf %191, %190 : vector<1x128xf32>
    %193 = arith.divf %191, %192 : vector<1x128xf32>
    %194 = arith.addf %183, %186 : vector<1x128xf32>
    %195 = arith.negf %194 : vector<1x128xf32>
    %196 = math.exp %195 : vector<1x128xf32>
    %cst_81 = arith.constant 1.000000e+00 : f32
    %197 = vector.broadcast %cst_81 : f32 to vector<1x128xf32>
    %198 = arith.addf %197, %196 : vector<1x128xf32>
    %199 = arith.divf %197, %198 : vector<1x128xf32>
    %200 = arith.mulf %193, %187 : vector<1x128xf32>
    %201 = arith.addf %184, %200 : vector<1x128xf32>
    %202 = math.tanh %201 : vector<1x128xf32>
    %cst_82 = arith.constant 1.000000e+00 : f32
    %203 = vector.broadcast %cst_82 : f32 to vector<1x128xf32>
    %204 = arith.subf %203, %199 : vector<1x128xf32>
    %205 = arith.mulf %204, %202 : vector<1x128xf32>
    %206 = arith.mulf %199, %173 : vector<1x128xf32>
    %207 = arith.addf %205, %206 : vector<1x128xf32>
    %208 = arith.index_cast %c4_i32 : i32 to index
    %c0_83 = arith.constant 0 : index
    %209 = vector.load %arg8[%208, %c0_83] : memref<8x128xf32, #tpu.memory_space<vmem>>, vector<1x128xf32>
    tpu.vector_store %arg8[%208, %c0_83], %207 {strides = array<i32>} : memref<8x128xf32, #tpu.memory_space<vmem>>, vector<1x128xf32>,
    %c5_i32 = arith.constant 5 : i32
    %210 = arith.index_cast %c5_i32 : i32 to index
    %c0_84 = arith.constant 0 : index
    %211 = vector.load %arg10[%210, %c0_84] : memref<8x384xf32, #tpu.memory_space<vmem>>, vector<1x384xf32>
    %c0_85 = arith.constant 0 : index
    %c0_86 = arith.constant 0 : index
    %212 = vector.load %arg5[%c0_85, %c0_86] : memref<128x384xf32, #tpu.memory_space<vmem>>, vector<128x384xf32>
    %cst_87 = arith.constant dense<0.000000e+00> : vector<1x384xf32>
    %213 = tpu.matmul %207, %212, %cst_87 {dimension_numbers = #tpu.dot_dimension_numbers<[1], [0], [0], [1], [0, 0, 1, 1], [], []>} : vector<1x128xf32>, vector<128x384xf32>, vector<1x384xf32> -> vector<1x384xf32>
    %c0_88 = arith.constant 0 : index
    %c0_89 = arith.constant 0 : index
    %214 = vector.load %arg7[%c0_88, %c0_89] : memref<1x384xf32, #tpu.memory_space<vmem>>, vector<1x384xf32>
    %215 = arith.addf %213, %214 : vector<1x384xf32>
    %216 = vector.extract_strided_slice %211 {offsets = [0, 0], sizes = [1, 128], strides = [1, 1]} : vector<1x384xf32> to vector<1x128xf32>
    %217 = vector.extract_strided_slice %211 {offsets = [0, 128], sizes = [1, 128], strides = [1, 1]} : vector<1x384xf32> to vector<1x128xf32>
    %218 = vector.extract_strided_slice %211 {offsets = [0, 256], sizes = [1, 128], strides = [1, 1]} : vector<1x384xf32> to vector<1x128xf32>
    %219 = vector.extract_strided_slice %215 {offsets = [0, 0], sizes = [1, 128], strides = [1, 1]} : vector<1x384xf32> to vector<1x128xf32>
    %220 = vector.extract_strided_slice %215 {offsets = [0, 128], sizes = [1, 128], strides = [1, 1]} : vector<1x384xf32> to vector<1x128xf32>
    %221 = vector.extract_strided_slice %215 {offsets = [0, 256], sizes = [1, 128], strides = [1, 1]} : vector<1x384xf32> to vector<1x128xf32>
    %222 = arith.addf %216, %219 : vector<1x128xf32>
    %223 = arith.negf %222 : vector<1x128xf32>
    %224 = math.exp %223 : vector<1x128xf32>
    %cst_90 = arith.constant 1.000000e+00 : f32
    %225 = vector.broadcast %cst_90 : f32 to vector<1x128xf32>
    %226 = arith.addf %225, %224 : vector<1x128xf32>
    %227 = arith.divf %225, %226 : vector<1x128xf32>
    %228 = arith.addf %217, %220 : vector<1x128xf32>
    %229 = arith.negf %228 : vector<1x128xf32>
    %230 = math.exp %229 : vector<1x128xf32>
    %cst_91 = arith.constant 1.000000e+00 : f32
    %231 = vector.broadcast %cst_91 : f32 to vector<1x128xf32>
    %232 = arith.addf %231, %230 : vector<1x128xf32>
    %233 = arith.divf %231, %232 : vector<1x128xf32>
    %234 = arith.mulf %227, %221 : vector<1x128xf32>
    %235 = arith.addf %218, %234 : vector<1x128xf32>
    %236 = math.tanh %235 : vector<1x128xf32>
    %cst_92 = arith.constant 1.000000e+00 : f32
    %237 = vector.broadcast %cst_92 : f32 to vector<1x128xf32>
    %238 = arith.subf %237, %233 : vector<1x128xf32>
    %239 = arith.mulf %238, %236 : vector<1x128xf32>
    %240 = arith.mulf %233, %207 : vector<1x128xf32>
    %241 = arith.addf %239, %240 : vector<1x128xf32>
    %242 = arith.index_cast %c5_i32 : i32 to index
    %c0_93 = arith.constant 0 : index
    %243 = vector.load %arg8[%242, %c0_93] : memref<8x128xf32, #tpu.memory_space<vmem>>, vector<1x128xf32>
    tpu.vector_store %arg8[%242, %c0_93], %241 {strides = array<i32>} : memref<8x128xf32, #tpu.memory_space<vmem>>, vector<1x128xf32>,
    %c6_i32 = arith.constant 6 : i32
    %244 = arith.index_cast %c6_i32 : i32 to index
    %c0_94 = arith.constant 0 : index
    %245 = vector.load %arg10[%244, %c0_94] : memref<8x384xf32, #tpu.memory_space<vmem>>, vector<1x384xf32>
    %c0_95 = arith.constant 0 : index
    %c0_96 = arith.constant 0 : index
    %246 = vector.load %arg5[%c0_95, %c0_96] : memref<128x384xf32, #tpu.memory_space<vmem>>, vector<128x384xf32>
    %cst_97 = arith.constant dense<0.000000e+00> : vector<1x384xf32>
    %247 = tpu.matmul %241, %246, %cst_97 {dimension_numbers = #tpu.dot_dimension_numbers<[1], [0], [0], [1], [0, 0, 1, 1], [], []>} : vector<1x128xf32>, vector<128x384xf32>, vector<1x384xf32> -> vector<1x384xf32>
    %c0_98 = arith.constant 0 : index
    %c0_99 = arith.constant 0 : index
    %248 = vector.load %arg7[%c0_98, %c0_99] : memref<1x384xf32, #tpu.memory_space<vmem>>, vector<1x384xf32>
    %249 = arith.addf %247, %248 : vector<1x384xf32>
    %250 = vector.extract_strided_slice %245 {offsets = [0, 0], sizes = [1, 128], strides = [1, 1]} : vector<1x384xf32> to vector<1x128xf32>
    %251 = vector.extract_strided_slice %245 {offsets = [0, 128], sizes = [1, 128], strides = [1, 1]} : vector<1x384xf32> to vector<1x128xf32>
    %252 = vector.extract_strided_slice %245 {offsets = [0, 256], sizes = [1, 128], strides = [1, 1]} : vector<1x384xf32> to vector<1x128xf32>
    %253 = vector.extract_strided_slice %249 {offsets = [0, 0], sizes = [1, 128], strides = [1, 1]} : vector<1x384xf32> to vector<1x128xf32>
    %254 = vector.extract_strided_slice %249 {offsets = [0, 128], sizes = [1, 128], strides = [1, 1]} : vector<1x384xf32> to vector<1x128xf32>
    %255 = vector.extract_strided_slice %249 {offsets = [0, 256], sizes = [1, 128], strides = [1, 1]} : vector<1x384xf32> to vector<1x128xf32>
    %256 = arith.addf %250, %253 : vector<1x128xf32>
    %257 = arith.negf %256 : vector<1x128xf32>
    %258 = math.exp %257 : vector<1x128xf32>
    %cst_100 = arith.constant 1.000000e+00 : f32
    %259 = vector.broadcast %cst_100 : f32 to vector<1x128xf32>
    %260 = arith.addf %259, %258 : vector<1x128xf32>
    %261 = arith.divf %259, %260 : vector<1x128xf32>
    %262 = arith.addf %251, %254 : vector<1x128xf32>
    %263 = arith.negf %262 : vector<1x128xf32>
    %264 = math.exp %263 : vector<1x128xf32>
    %cst_101 = arith.constant 1.000000e+00 : f32
    %265 = vector.broadcast %cst_101 : f32 to vector<1x128xf32>
    %266 = arith.addf %265, %264 : vector<1x128xf32>
    %267 = arith.divf %265, %266 : vector<1x128xf32>
    %268 = arith.mulf %261, %255 : vector<1x128xf32>
    %269 = arith.addf %252, %268 : vector<1x128xf32>
    %270 = math.tanh %269 : vector<1x128xf32>
    %cst_102 = arith.constant 1.000000e+00 : f32
    %271 = vector.broadcast %cst_102 : f32 to vector<1x128xf32>
    %272 = arith.subf %271, %267 : vector<1x128xf32>
    %273 = arith.mulf %272, %270 : vector<1x128xf32>
    %274 = arith.mulf %267, %241 : vector<1x128xf32>
    %275 = arith.addf %273, %274 : vector<1x128xf32>
    %276 = arith.index_cast %c6_i32 : i32 to index
    %c0_103 = arith.constant 0 : index
    %277 = vector.load %arg8[%276, %c0_103] : memref<8x128xf32, #tpu.memory_space<vmem>>, vector<1x128xf32>
    tpu.vector_store %arg8[%276, %c0_103], %275 {strides = array<i32>} : memref<8x128xf32, #tpu.memory_space<vmem>>, vector<1x128xf32>,
    %c7_i32 = arith.constant 7 : i32
    %278 = arith.index_cast %c7_i32 : i32 to index
    %c0_104 = arith.constant 0 : index
    %279 = vector.load %arg10[%278, %c0_104] : memref<8x384xf32, #tpu.memory_space<vmem>>, vector<1x384xf32>
    %c0_105 = arith.constant 0 : index
    %c0_106 = arith.constant 0 : index
    %280 = vector.load %arg5[%c0_105, %c0_106] : memref<128x384xf32, #tpu.memory_space<vmem>>, vector<128x384xf32>
    %cst_107 = arith.constant dense<0.000000e+00> : vector<1x384xf32>
    %281 = tpu.matmul %275, %280, %cst_107 {dimension_numbers = #tpu.dot_dimension_numbers<[1], [0], [0], [1], [0, 0, 1, 1], [], []>} : vector<1x128xf32>, vector<128x384xf32>, vector<1x384xf32> -> vector<1x384xf32>
    %c0_108 = arith.constant 0 : index
    %c0_109 = arith.constant 0 : index
    %282 = vector.load %arg7[%c0_108, %c0_109] : memref<1x384xf32, #tpu.memory_space<vmem>>, vector<1x384xf32>
    %283 = arith.addf %281, %282 : vector<1x384xf32>
    %284 = vector.extract_strided_slice %279 {offsets = [0, 0], sizes = [1, 128], strides = [1, 1]} : vector<1x384xf32> to vector<1x128xf32>
    %285 = vector.extract_strided_slice %279 {offsets = [0, 128], sizes = [1, 128], strides = [1, 1]} : vector<1x384xf32> to vector<1x128xf32>
    %286 = vector.extract_strided_slice %279 {offsets = [0, 256], sizes = [1, 128], strides = [1, 1]} : vector<1x384xf32> to vector<1x128xf32>
    %287 = vector.extract_strided_slice %283 {offsets = [0, 0], sizes = [1, 128], strides = [1, 1]} : vector<1x384xf32> to vector<1x128xf32>
    %288 = vector.extract_strided_slice %283 {offsets = [0, 128], sizes = [1, 128], strides = [1, 1]} : vector<1x384xf32> to vector<1x128xf32>
    %289 = vector.extract_strided_slice %283 {offsets = [0, 256], sizes = [1, 128], strides = [1, 1]} : vector<1x384xf32> to vector<1x128xf32>
    %290 = arith.addf %284, %287 : vector<1x128xf32>
    %291 = arith.negf %290 : vector<1x128xf32>
    %292 = math.exp %291 : vector<1x128xf32>
    %cst_110 = arith.constant 1.000000e+00 : f32
    %293 = vector.broadcast %cst_110 : f32 to vector<1x128xf32>
    %294 = arith.addf %293, %292 : vector<1x128xf32>
    %295 = arith.divf %293, %294 : vector<1x128xf32>
    %296 = arith.addf %285, %288 : vector<1x128xf32>
    %297 = arith.negf %296 : vector<1x128xf32>
    %298 = math.exp %297 : vector<1x128xf32>
    %cst_111 = arith.constant 1.000000e+00 : f32
    %299 = vector.broadcast %cst_111 : f32 to vector<1x128xf32>
    %300 = arith.addf %299, %298 : vector<1x128xf32>
    %301 = arith.divf %299, %300 : vector<1x128xf32>
    %302 = arith.mulf %295, %289 : vector<1x128xf32>
    %303 = arith.addf %286, %302 : vector<1x128xf32>
    %304 = math.tanh %303 : vector<1x128xf32>
    %cst_112 = arith.constant 1.000000e+00 : f32
    %305 = vector.broadcast %cst_112 : f32 to vector<1x128xf32>
    %306 = arith.subf %305, %301 : vector<1x128xf32>
    %307 = arith.mulf %306, %304 : vector<1x128xf32>
    %308 = arith.mulf %301, %275 : vector<1x128xf32>
    %309 = arith.addf %307, %308 : vector<1x128xf32>
    %310 = arith.index_cast %c7_i32 : i32 to index
    %c0_113 = arith.constant 0 : index
    %311 = vector.load %arg8[%310, %c0_113] : memref<8x128xf32, #tpu.memory_space<vmem>>, vector<1x128xf32>
    tpu.vector_store %arg8[%310, %c0_113], %309 {strides = array<i32>} : memref<8x128xf32, #tpu.memory_space<vmem>>, vector<1x128xf32>,
    %c8_i32 = arith.constant 8 : i32
    return
  }
  func.func @transform_0(%arg0: i32, %arg1: memref<8xi32, #tpu.memory_space<smem>>) -> (i32, i32) {
    %c0_i32 = arith.constant 0 : i32
    %c0_i32_0 = arith.constant 0 : i32
    %c0_i32_1 = arith.constant 0 : i32
    return %c0_i32, %c0_i32_0 : i32, i32
  }
  func.func @transform_1(%arg0: i32, %arg1: memref<8xi32, #tpu.memory_space<smem>>) -> (i32, i32) {
    %c0_i32 = arith.constant 0 : i32
    %c0_i32_0 = arith.constant 0 : i32
    %c0_i32_1 = arith.constant 0 : i32
    return %c0_i32, %c0_i32_0 : i32, i32
  }
  func.func @transform_2(%arg0: i32, %arg1: memref<8xi32, #tpu.memory_space<smem>>) -> (i32, i32) {
    %c0_i32 = arith.constant 0 : i32
    %c0_i32_0 = arith.constant 0 : i32
    %c0_i32_1 = arith.constant 0 : i32
    return %c0_i32, %c0_i32_0 : i32, i32
  }
  func.func @transform_3(%arg0: i32, %arg1: memref<8xi32, #tpu.memory_space<smem>>) -> (i32, i32) {
    %c0_i32 = arith.constant 0 : i32
    %c0_i32_0 = arith.constant 0 : i32
    %c0_i32_1 = arith.constant 0 : i32
    return %c0_i32, %c0_i32_0 : i32, i32
  }
  func.func @transform_4(%arg0: i32, %arg1: memref<8xi32, #tpu.memory_space<smem>>) -> (i32, i32) {
    %c0_i32 = arith.constant 0 : i32
    %c0_i32_0 = arith.constant 0 : i32
    %c0_i32_1 = arith.constant 0 : i32
    return %c0_i32, %c0_i32_0 : i32, i32
  }
  func.func @transform_5(%arg0: i32, %arg1: memref<8xi32, #tpu.memory_space<smem>>) -> (i32, i32) {
    %c0_i32 = arith.constant 0 : i32
    %c0_i32_0 = arith.constant 0 : i32
    %c0_i32_1 = arith.constant 0 : i32
    return %c0_i32, %c0_i32_0 : i32, i32
  }
  func.func @transform_6(%arg0: i32, %arg1: memref<8xi32, #tpu.memory_space<smem>>) -> (i32, i32) {
    %c0_i32 = arith.constant 0 : i32
    %c0_i32_0 = arith.constant 0 : i32
    %c0_i32_1 = arith.constant 0 : i32
    return %c0_i32, %c0_i32_0 : i32, i32
  }
}

</mosaic_0001>

<llo_original>
// kernel: encode_sequence.1
$region0: #{encode_sequence.1}
  #allocation0 [shape = 'u32[]', space=smem, size = 0x4, offset = 0x4, fixed_abs, tag = 'smem constant byte address 0x4 - core index']
  #allocation1 [shape = 'u32[144,128]{1,0:T(1,128)}', space=vmem, size = 0x12000, scoped, tag = 'internal scratch']
  #allocation2 [shape = 'f32[8,128]{1,0:T(8,128)}', space=vmem, size = 0x1000, scoped, tag = 'scratch operand']
  #allocation3 [shape = 'f32[8,384]{1,0:T(8,128)}', space=vmem, size = 0x3000, scoped, tag = 'scratch operand']
  #allocation4 [shape = 's32[1]{0}', space=sflag, size = 0x4, scoped, tag = 'scoped memory for encode_sequence.1']
  #allocation5 [shape = 'u8[512]{0}', space=smem, size = 0x200, scoped, tag = 'prefetched SMEM operand 0']
  %s0 = inlined_call_operand.vmem [shape: s32[8], index: 0, kind: input, shape index: {}]
  %s1 = inlined_call_operand.hbm [shape: f32[50,128], index: 1, kind: input, shape index: {}]
  %s2 = inlined_call_operand.vmem [shape: f32[1,128], index: 2, kind: input, shape index: {}]
  %s3 = inlined_call_operand.hbm [shape: f32[128,384], index: 3, kind: input, shape index: {}]
  %s4 = inlined_call_operand.hbm [shape: f32[128,384], index: 4, kind: input, shape index: {}]
  %s5 = inlined_call_operand.vmem [shape: f32[1,384], index: 5, kind: input, shape index: {}]
  %s6 = inlined_call_operand.hbm [shape: f32[1,384], index: 6, kind: input, shape index: {}]
  %s7 = inlined_call_operand.vmem [shape: f32[8,128], index: 7, kind: output, shape index: {}]
  %s8 = sld [smem:[#allocation0]]
  $region50: #{encode_sequence.1} parent=0
    _
  %s10 = ssub.s32 1, %s8
  %s11 = scalar_select 0, %s10, %s8
  %s12 = sshll.u32 %s0, 4
  %s13 = int_to_ptr.vmem [resolvable:$true] %s12
  %15 = dma.vmem_to_smem %s13, 16, [#allocation5], [#allocation4]
  %16 = dma.done [#allocation4], 16
  %17 = sfence
  $region1: #{encode_sequence.1} parent=0
    #allocation6 [shape = 'u8[28672]{0}', space=vmem, size = 0x7000, scoped, tag = 'input window, operand 1, single buffered']
    #allocation7 [shape = 's32[1]{0}', space=sflag, size = 0x4, scoped, tag = 'scoped memory for encode_sequence.1']
    #allocation8 [shape = 'u8[196608]{0}', space=vmem, size = 0x30000, scoped, tag = 'input window, operand 3, single buffered']
    #allocation9 [shape = 's32[1]{0}', space=sflag, size = 0x4, scoped, tag = 'scoped memory for encode_sequence.1']
    #allocation10 [shape = 'u8[196608]{0}', space=vmem, size = 0x30000, scoped, tag = 'input window, operand 4, single buffered']
    #allocation11 [shape = 'u8[1536]{0}', space=vmem, size = 0x800, scoped, tag = 'input window, operand 6, single buffered']
    #allocation12 [shape = 's32[1]{0}', space=sflag, size = 0x4, scoped, tag = 'scoped memory for encode_sequence.1']
    %18 = vsyncpa [#allocation7], 0
    %19 = vsyncpa [#allocation9], 0
    %20 = vsyncpa [#allocation12], 0
    // Predicated region
    $region2: #{encode_sequence.1} parent=1 // pred_check
      _
    $region3: #{encode_sequence.1} parent=1 // pred_check_branch
      %22 = sbr.rel (0) target = $region5
    $region4: #{encode_sequence.1} parent=1 // pred_region
      %s24 = ssub.s32 896, 896
      %25 = vsyncadd [#allocation7], %s24
      %s26 = sshll.u32 [#allocation6], 4
      %s27 = int_to_ptr.vmem [resolvable:$true] %s26
      %32 = dma.hbm_to_vmem [thread:$0]  %s1, 896, %s27, [#allocation7], 128, 128, 8
    $region5: #{encode_sequence.1} parent=1 // pred_fallthru
      _
    // Predicated region
    $region6: #{encode_sequence.1} parent=1 // pred_check
      _
    $region7: #{encode_sequence.1} parent=1 // pred_check_branch
      %34 = sbr.rel (0) target = $region9
    $region8: #{encode_sequence.1} parent=1 // pred_region
      _
    $region9: #{encode_sequence.1} parent=1 // pred_fallthru
      _
    // Predicated region
    $region10: #{encode_sequence.1} parent=1 // pred_check
      _
    $region11: #{encode_sequence.1} parent=1 // pred_check_branch
      %36 = sbr.rel (0) target = $region13
    $region12: #{encode_sequence.1} parent=1 // pred_region
      %s38 = ssub.s32 6144, 6144
      %39 = vsyncadd [#allocation9], %s38
      %s40 = sshll.u32 [#allocation8], 4
      %s41 = int_to_ptr.vmem [resolvable:$true] %s40
      %46 = dma.hbm_to_vmem [thread:$0]  %s3, 6144, %s41, [#allocation9], 384, 384, 24
    $region13: #{encode_sequence.1} parent=1 // pred_fallthru
      _
    // Predicated region
    $region14: #{encode_sequence.1} parent=1 // pred_check
      _
    $region15: #{encode_sequence.1} parent=1 // pred_check_branch
      %48 = sbr.rel (0) target = $region17
    $region16: #{encode_sequence.1} parent=1 // pred_region
      %s50 = ssub.s32 6144, 6144
      %51 = vsyncadd [#allocation9], %s50
      %s52 = sshll.u32 [#allocation10], 4
      %s53 = int_to_ptr.vmem [resolvable:$true] %s52
      %58 = dma.hbm_to_vmem [thread:$0]  %s4, 6144, %s53, [#allocation9], 384, 384, 24
    $region17: #{encode_sequence.1} parent=1 // pred_fallthru
      _
    // Predicated region
    $region18: #{encode_sequence.1} parent=1 // pred_check
      _
    $region19: #{encode_sequence.1} parent=1 // pred_check_branch
      %60 = sbr.rel (0) target = $region21
    $region20: #{encode_sequence.1} parent=1 // pred_region
      _
    $region21: #{encode_sequence.1} parent=1 // pred_fallthru
      _
    // Predicated region
    $region22: #{encode_sequence.1} parent=1 // pred_check
      _
    $region23: #{encode_sequence.1} parent=1 // pred_check_branch
      %62 = sbr.rel (0) target = $region25
    $region24: #{encode_sequence.1} parent=1 // pred_region
      %s64 = ssub.s32 48, 48
      %65 = vsyncadd [#allocation12], %s64
      %s67 = sshll.u32 [#allocation11], 4
      %s68 = int_to_ptr.vmem [resolvable:$true] %s67
      %70 = dma.hbm_to_vmem [thread:$0]  %s6, 48, %s68, [#allocation12]
    $region25: #{encode_sequence.1} parent=1 // pred_fallthru
      _
    // Predicated region
    $region26: #{encode_sequence.1} parent=1 // pred_check
      _
    $region27: #{encode_sequence.1} parent=1 // pred_check_branch
      %72 = sbr.rel (0) target = $region29
    $region28: #{encode_sequence.1} parent=1 // pred_region
      %73 = dma.done [#allocation7], 896
    $region29: #{encode_sequence.1} parent=1 // pred_fallthru
      _
    // Predicated region
    $region30: #{encode_sequence.1} parent=1 // pred_check
      _
    $region31: #{encode_sequence.1} parent=1 // pred_check_branch
      %75 = sbr.rel (0) target = $region33
    $region32: #{encode_sequence.1} parent=1 // pred_region
      %76 = dma.done [#allocation9], 6144
    $region33: #{encode_sequence.1} parent=1 // pred_fallthru
      _
    // Predicated region
    $region34: #{encode_sequence.1} parent=1 // pred_check
      _
    $region35: #{encode_sequence.1} parent=1 // pred_check_branch
      %78 = sbr.rel (0) target = $region37
    $region36: #{encode_sequence.1} parent=1 // pred_region
      %79 = dma.done [#allocation9], 6144
    $region37: #{encode_sequence.1} parent=1 // pred_fallthru
      _
    // Predicated region
    $region38: #{encode_sequence.1} parent=1 // pred_check
      _
    $region39: #{encode_sequence.1} parent=1 // pred_check_branch
      %81 = sbr.rel (0) target = $region41
    $region40: #{encode_sequence.1} parent=1 // pred_region
      %82 = dma.done [#allocation12], 48
    $region41: #{encode_sequence.1} parent=1 // pred_fallthru
      _
    %s83 = sld [smem:[#allocation5]]
    %s84 = scalar_lea.vmem [#allocation6], %s83
    %v85 = vld [vmem:[%s84] sm:$0x1]
    %86 = vst [vmem:[#allocation2] sm:$0x1] %v85
    %s87 = sld [smem:[#allocation5 + $0x1]]
    %s88 = scalar_lea.vmem [#allocation6], %s87
    %v89 = vld [vmem:[%s88] sm:$0x1]
    %90 = vst [vmem:[#allocation2 + $0x1] sm:$0x1] %v89
    %s91 = sld [smem:[#allocation5 + $0x2]]
    %s92 = scalar_lea.vmem [#allocation6], %s91
    %v93 = vld [vmem:[%s92] sm:$0x1]
    %94 = vst [vmem:[#allocation2 + $0x2] sm:$0x1] %v93
    %s95 = sld [smem:[#allocation5 + $0x3]]
    %s96 = scalar_lea.vmem [#allocation6], %s95
    %v97 = vld [vmem:[%s96] sm:$0x1]
    %98 = vst [vmem:[#allocation2 + $0x3] sm:$0x1] %v97
    %s99 = sld [smem:[#allocation5 + $0x4]]
    %s100 = scalar_lea.vmem [#allocation6], %s99
    %v101 = vld [vmem:[%s100] sm:$0x1]
    %102 = vst [vmem:[#allocation2 + $0x4] sm:$0x1] %v101
    %s103 = sld [smem:[#allocation5 + $0x5]]
    %s104 = scalar_lea.vmem [#allocation6], %s103
    %v105 = vld [vmem:[%s104] sm:$0x1]
    %106 = vst [vmem:[#allocation2 + $0x5] sm:$0x1] %v105
    %s107 = sld [smem:[#allocation5 + $0x6]]
    %s108 = scalar_lea.vmem [#allocation6], %s107
    %v109 = vld [vmem:[%s108] sm:$0x1]
    %110 = vst [vmem:[#allocation2 + $0x6] sm:$0x1] %v109
    %s111 = sld [smem:[#allocation5 + $0x7]]
    %s112 = scalar_lea.vmem [#allocation6], %s111
    %v113 = vld [vmem:[%s112] sm:$0x1]
    %114 = vst [vmem:[#allocation2 + $0x7] sm:$0x1] %v113
    %v115 = vld [vmem:[#allocation2] sm:$0xff]
    %v116 = vld [vmem:[#allocation8] sm:$0xff]
    %v117 = vld [vmem:[#allocation8 + $0x8] sm:$0xff]
    %v118 = vld [vmem:[#allocation8 + $0x10] sm:$0xff]
    %v119 = vld [vmem:[#allocation8 + $0x18] sm:$0xff]
    %v120 = vld [vmem:[#allocation8 + $0x20] sm:$0xff]
    %v121 = vld [vmem:[#allocation8 + $0x28] sm:$0xff]
    %v122 = vld [vmem:[#allocation8 + $0x30] sm:$0xff]
    %v123 = vld [vmem:[#allocation8 + $0x38] sm:$0xff]
    %v124 = vld [vmem:[#allocation8 + $0x40] sm:$0xff]
    %v125 = vld [vmem:[#allocation8 + $0x48] sm:$0xff]
    %v126 = vld [vmem:[#allocation8 + $0x50] sm:$0xff]
    %v127 = vld [vmem:[#allocation8 + $0x58] sm:$0xff]
    %v128 = vld [vmem:[#allocation8 + $0x60] sm:$0xff]
    %v129 = vld [vmem:[#allocation8 + $0x68] sm:$0xff]
    %v130 = vld [vmem:[#allocation8 + $0x70] sm:$0xff]
    %v131 = vld [vmem:[#allocation8 + $0x78] sm:$0xff]
    %v132 = vld [vmem:[#allocation8 + $0x80] sm:$0xff]
    %v133 = vld [vmem:[#allocation8 + $0x88] sm:$0xff]
    %v134 = vld [vmem:[#allocation8 + $0x90] sm:$0xff]
    %v135 = vld [vmem:[#allocation8 + $0x98] sm:$0xff]
    %v136 = vld [vmem:[#allocation8 + $0xa0] sm:$0xff]
    %v137 = vld [vmem:[#allocation8 + $0xa8] sm:$0xff]
    %v138 = vld [vmem:[#allocation8 + $0xb0] sm:$0xff]
    %v139 = vld [vmem:[#allocation8 + $0xb8] sm:$0xff]
    %v140 = vld [vmem:[#allocation8 + $0xc0] sm:$0xff]
    %v141 = vld [vmem:[#allocation8 + $0xc8] sm:$0xff]
    %v142 = vld [vmem:[#allocation8 + $0xd0] sm:$0xff]
    %v143 = vld [vmem:[#allocation8 + $0xd8] sm:$0xff]
    %v144 = vld [vmem:[#allocation8 + $0xe0] sm:$0xff]
    %v145 = vld [vmem:[#allocation8 + $0xe8] sm:$0xff]
    %v146 = vld [vmem:[#allocation8 + $0xf0] sm:$0xff]
    %v147 = vld [vmem:[#allocation8 + $0xf8] sm:$0xff]
    %v148 = vld [vmem:[#allocation8 + $0x100] sm:$0xff]
    %v149 = vld [vmem:[#allocation8 + $0x108] sm:$0xff]
    %v150 = vld [vmem:[#allocation8 + $0x110] sm:$0xff]
    %v151 = vld [vmem:[#allocation8 + $0x118] sm:$0xff]
    %v152 = vld [vmem:[#allocation8 + $0x120] sm:$0xff]
    %v153 = vld [vmem:[#allocation8 + $0x128] sm:$0xff]
    %v154 = vld [vmem:[#allocation8 + $0x130] sm:$0xff]
    %v155 = vld [vmem:[#allocation8 + $0x138] sm:$0xff]
    %v156 = vld [vmem:[#allocation8 + $0x140] sm:$0xff]
    %v157 = vld [vmem:[#allocation8 + $0x148] sm:$0xff]
    %v158 = vld [vmem:[#allocation8 + $0x150] sm:$0xff]
    %v159 = vld [vmem:[#allocation8 + $0x158] sm:$0xff]
    %v160 = vld [vmem:[#allocation8 + $0x160] sm:$0xff]
    %v161 = vld [vmem:[#allocation8 + $0x168] sm:$0xff]
    %v162 = vld [vmem:[#allocation8 + $0x170] sm:$0xff]
    %v163 = vld [vmem:[#allocation8 + $0x178] sm:$0xff]
    %v164 = vld [vmem:[%s5] sm:$0x7]
    %v166 = vlaneseq
    %v167 = vshrl.u32 %v166, 7
    %v168 = vsub.s32 0, %v167
    %v169 = vrot.slane %v164, %v168
    %v170 = vlaneseq
    %v171 = vshrl.u32 %v170, 7
    %v172 = vsub.s32 1, %v171
    %v173 = vrot.slane %v164, %v172
    %v174 = vlaneseq
    %v175 = vshrl.u32 %v174, 7
    %v176 = vsub.s32 2, %v175
    %v177 = vrot.slane %v164, %v176
    %181 = vmatprep.subr.mxu0 %v162
    %182 = vmatpush1.msra.mxu0 %v161
    %183 = vmatprep.subr.mxu0 %v159
    %184 = vmatpush1.msra.mxu0 %v158
    %185 = vmatprep.subr.mxu0 %v156
    %186 = vmatpush1.msra.mxu0 %v155
    %187 = vmatprep.subr.mxu0 %v153
    %188 = vmatpush1.msra.mxu0 %v152
    %189 = vmatprep.subr.mxu0 %v150
    %190 = vmatpush1.msra.mxu0 %v149
    %191 = vmatprep.subr.mxu0 %v147
    %192 = vmatpush1.msra.mxu0 %v146
    %193 = vmatprep.subr.mxu0 %v144
    %194 = vmatpush1.msra.mxu0 %v143
    %195 = vmatprep.subr.mxu0 %v141
    %196 = vmatpush1.msra.mxu0 %v140
    %197 = vmatprep.subr.mxu0 %v138
    %198 = vmatpush1.msra.mxu0 %v137
    %199 = vmatprep.subr.mxu0 %v135
    %200 = vmatpush1.msra.mxu0 %v134
    %201 = vmatprep.subr.mxu0 %v132
    %202 = vmatpush1.msra.mxu0 %v131
    %203 = vmatprep.subr.mxu0 %v129
    %204 = vmatpush1.msra.mxu0 %v128
    %205 = vmatprep.subr.mxu0 %v126
    %206 = vmatpush1.msra.mxu0 %v125
    %207 = vmatprep.subr.mxu0 %v123
    %208 = vmatpush1.msra.mxu0 %v122
    %209 = vmatprep.subr.mxu0 %v120
    %210 = vmatpush1.msra.mxu0 %v119
    %211 = vmatprep.subr.mxu0 %v117
    %212 = vmatpush1.msra.mxu0 %v116
    %213 = vmatprep.subr.mxu0 0.0
    %214 = vmatpush2.msra.mxu0 0.0
    %215 = vmatprep.subr.mxu0 0.0
    %216 = vmatpush2.msra.mxu0 0.0
    %217 = vmatprep.subr.mxu0 0.0
    %218 = vmatpush2.msra.mxu0 0.0
    %219 = vmatprep.subr.mxu0 0.0
    %220 = vmatpush2.msra.mxu0 0.0
    %221 = vmatprep.subr.mxu0 0.0
    %222 = vmatpush2.msra.mxu0 0.0
    %223 = vmatprep.subr.mxu0 0.0
    %224 = vmatpush2.msra.mxu0 0.0
    %225 = vmatprep.subr.mxu0 0.0
    %226 = vmatpush2.msra.mxu0 0.0
    %227 = vmatprep.subr.mxu0 0.0
    %228 = vmatpush2.msra.mxu0 0.0
    %229 = vmatprep.subr.mxu0 0.0
    %230 = vmatpush2.msra.mxu0 0.0
    %231 = vmatprep.subr.mxu0 0.0
    %232 = vmatpush2.msra.mxu0 0.0
    %233 = vmatprep.subr.mxu0 0.0
    %234 = vmatpush2.msra.mxu0 0.0
    %235 = vmatprep.subr.mxu0 0.0
    %236 = vmatpush2.msra.mxu0 0.0
    %237 = vmatprep.subr.mxu0 0.0
    %238 = vmatpush2.msra.mxu0 0.0
    %239 = vmatprep.subr.mxu0 0.0
    %240 = vmatpush2.msra.mxu0 0.0
    %241 = vmatprep.subr.mxu0 0.0
    %242 = vmatpush2.msra.mxu0 0.0
    %243 = vmatprep.subr.mxu0 0.0
    %244 = vmatpush2.msra.mxu0 0.0
    %245 = vmatprep.mubr.f32.mxu0 0.0
    %246 = vmatmul.mubr.f32.gmra.mxu0 %v115
    %v247 = vpop.f32.mrf.mxu0
    %v248 = vadd.f32 %v169, %v247
    %v249 = vpop.f32.mrf.mxu0
    %v250 = vadd.f32 %v173, %v249
    %251 = vdwg.mxu0
    %252 = vmatprep.subr.mxu0 0.0
    %253 = vmatpush1.msra.mxu0 %v163
    %254 = vmatprep.subr.mxu0 0.0
    %255 = vmatpush1.msra.mxu0 %v160
    %256 = vmatprep.subr.mxu0 0.0
    %257 = vmatpush1.msra.mxu0 %v157
    %258 = vmatprep.subr.mxu0 0.0
    %259 = vmatpush1.msra.mxu0 %v154
    %260 = vmatprep.subr.mxu0 0.0
    %261 = vmatpush1.msra.mxu0 %v151
    %262 = vmatprep.subr.mxu0 0.0
    %263 = vmatpush1.msra.mxu0 %v148
    %264 = vmatprep.subr.mxu0 0.0
    %265 = vmatpush1.msra.mxu0 %v145
    %266 = vmatprep.subr.mxu0 0.0
    %267 = vmatpush1.msra.mxu0 %v142
    %268 = vmatprep.subr.mxu0 0.0
    %269 = vmatpush1.msra.mxu0 %v139
    %270 = vmatprep.subr.mxu0 0.0
    %271 = vmatpush1.msra.mxu0 %v136
    %272 = vmatprep.subr.mxu0 0.0
    %273 = vmatpush1.msra.mxu0 %v133
    %274 = vmatprep.subr.mxu0 0.0
    %275 = vmatpush1.msra.mxu0 %v130
    %276 = vmatprep.subr.mxu0 0.0
    %277 = vmatpush1.msra.mxu0 %v127
    %278 = vmatprep.subr.mxu0 0.0
    %279 = vmatpush1.msra.mxu0 %v124
    %280 = vmatprep.subr.mxu0 0.0
    %281 = vmatpush1.msra.mxu0 %v121
    %282 = vmatprep.subr.mxu0 0.0
    %283 = vmatpush1.msra.mxu0 %v118
    %284 = vmatprep.subr.mxu0 0.0
    %285 = vmatpush2.msra.mxu0 0.0
    %286 = vmatprep.subr.mxu0 0.0
    %287 = vmatpush2.msra.mxu0 0.0
    %288 = vmatprep.subr.mxu0 0.0
    %289 = vmatpush2.msra.mxu0 0.0
    %290 = vmatprep.subr.mxu0 0.0
    %291 = vmatpush2.msra.mxu0 0.0
    %292 = vmatprep.subr.mxu0 0.0
    %293 = vmatpush2.msra.mxu0 0.0
    %294 = vmatprep.subr.mxu0 0.0
    %295 = vmatpush2.msra.mxu0 0.0
    %296 = vmatprep.subr.mxu0 0.0
    %297 = vmatpush2.msra.mxu0 0.0
    %298 = vmatprep.subr.mxu0 0.0
    %299 = vmatpush2.msra.mxu0 0.0
    %300 = vmatprep.subr.mxu0 0.0
    %301 = vmatpush2.msra.mxu0 0.0
    %302 = vmatprep.subr.mxu0 0.0
    %303 = vmatpush2.msra.mxu0 0.0
    %304 = vmatprep.subr.mxu0 0.0
    %305 = vmatpush2.msra.mxu0 0.0
    %306 = vmatprep.subr.mxu0 0.0
    %307 = vmatpush2.msra.mxu0 0.0
    %308 = vmatprep.subr.mxu0 0.0
    %309 = vmatpush2.msra.mxu0 0.0
    %310 = vmatprep.subr.mxu0 0.0
    %311 = vmatpush2.msra.mxu0 0.0
    %312 = vmatprep.subr.mxu0 0.0
    %313 = vmatpush2.msra.mxu0 0.0
    %314 = vmatprep.subr.mxu0 0.0
    %315 = vmatpush2.msra.mxu0 0.0
    %316 = vmatprep.mubr.f32.mxu0 0.0
    %317 = vmatmul.mubr.f32.gmra.mxu0 %v115
    %v318 = vpop.f32.mrf.mxu0
    %v319 = vadd.f32 %v177, %v318
    %v320 = vpop.f32.mrf.mxu0
    %321 = vdwg.mxu0
    %322 = vst [vmem:[#allocation3] sm:$0xff] %v248
    %323 = vst [vmem:[#allocation3 + $0x8] sm:$0xff] %v250
    %324 = vst [vmem:[#allocation3 + $0x10] sm:$0xff] %v319
    %v325 = vld [vmem:[%s2] sm:$0x1]
    %v326 = vld [vmem:[#allocation3] ss:$8 sm:$0x7]
    %v327 = vld [vmem:[#allocation10] sm:$0xff]
    %v328 = vld [vmem:[#allocation10 + $0x8] sm:$0xff]
    %v329 = vld [vmem:[#allocation10 + $0x10] sm:$0xff]
    %v330 = vld [vmem:[#allocation10 + $0x18] sm:$0xff]
    %v331 = vld [vmem:[#allocation10 + $0x20] sm:$0xff]
    %v332 = vld [vmem:[#allocation10 + $0x28] sm:$0xff]
    %v333 = vld [vmem:[#allocation10 + $0x30] sm:$0xff]
    %v334 = vld [vmem:[#allocation10 + $0x38] sm:$0xff]
    %v335 = vld [vmem:[#allocation10 + $0x40] sm:$0xff]
    %v336 = vld [vmem:[#allocation10 + $0x48] sm:$0xff]
    %v337 = vld [vmem:[#allocation10 + $0x50] sm:$0xff]
    %v338 = vld [vmem:[#allocation10 + $0x58] sm:$0xff]
    %v339 = vld [vmem:[#allocation10 + $0x60] sm:$0xff]
    %v340 = vld [vmem:[#allocation10 + $0x68] sm:$0xff]
    %v341 = vld [vmem:[#allocation10 + $0x70] sm:$0xff]
    %v342 = vld [vmem:[#allocation10 + $0x78] sm:$0xff]
    %v343 = vld [vmem:[#allocation10 + $0x80] sm:$0xff]
    %v344 = vld [vmem:[#allocation10 + $0x88] sm:$0xff]
    %v345 = vld [vmem:[#allocation10 + $0x90] sm:$0xff]
    %v346 = vld [vmem:[#allocation10 + $0x98] sm:$0xff]
    %v347 = vld [vmem:[#allocation10 + $0xa0] sm:$0xff]
    %v348 = vld [vmem:[#allocation10 + $0xa8] sm:$0xff]
    %v349 = vld [vmem:[#allocation10 + $0xb0] sm:$0xff]
    %v350 = vld [vmem:[#allocation10 + $0xb8] sm:$0xff]
    %v351 = vld [vmem:[#allocation10 + $0xc0] sm:$0xff]
    %v352 = vld [vmem:[#allocation10 + $0xc8] sm:$0xff]
    %v353 = vld [vmem:[#allocation10 + $0xd0] sm:$0xff]
    %v354 = vld [vmem:[#allocation10 + $0xd8] sm:$0xff]
    %v355 = vld [vmem:[#allocation10 + $0xe0] sm:$0xff]
    %v356 = vld [vmem:[#allocation10 + $0xe8] sm:$0xff]
    %v357 = vld [vmem:[#allocation10 + $0xf0] sm:$0xff]
    %v358 = vld [vmem:[#allocation10 + $0xf8] sm:$0xff]
    %v359 = vld [vmem:[#allocation10 + $0x100] sm:$0xff]
    %v360 = vld [vmem:[#allocation10 + $0x108] sm:$0xff]
    %v361 = vld [vmem:[#allocation10 + $0x110] sm:$0xff]
    %v362 = vld [vmem:[#allocation10 + $0x118] sm:$0xff]
    %v363 = vld [vmem:[#allocation10 + $0x120] sm:$0xff]
    %v364 = vld [vmem:[#allocation10 + $0x128] sm:$0xff]
    %v365 = vld [vmem:[#allocation10 + $0x130] sm:$0xff]
    %v366 = vld [vmem:[#allocation10 + $0x138] sm:$0xff]
    %v367 = vld [vmem:[#allocation10 + $0x140] sm:$0xff]
    %v368 = vld [vmem:[#allocation10 + $0x148] sm:$0xff]
    %v369 = vld [vmem:[#allocation10 + $0x150] sm:$0xff]
    %v370 = vld [vmem:[#allocation10 + $0x158] sm:$0xff]
    %v371 = vld [vmem:[#allocation10 + $0x160] sm:$0xff]
    %v372 = vld [vmem:[#allocation10 + $0x168] sm:$0xff]
    %v373 = vld [vmem:[#allocation10 + $0x170] sm:$0xff]
    %v374 = vld [vmem:[#allocation10 + $0x178] sm:$0xff]
    %v375 = vld [vmem:[#allocation11] sm:$0x7]
    %v377 = vlaneseq
    %v378 = vshrl.u32 %v377, 7
    %v379 = vsub.s32 0, %v378
    %v380 = vrot.slane %v375, %v379
    %v381 = vlaneseq
    %v382 = vshrl.u32 %v381, 7
    %v383 = vsub.s32 1, %v382
    %v384 = vrot.slane %v375, %v383
    %v385 = vlaneseq
    %v386 = vshrl.u32 %v385, 7
    %v387 = vsub.s32 2, %v386
    %v388 = vrot.slane %v375, %v387
    %392 = vmatprep.subr.mxu0 %v373
    %393 = vmatpush1.msra.mxu0 %v372
    %394 = vmatprep.subr.mxu0 %v370
    %395 = vmatpush1.msra.mxu0 %v369
    %396 = vmatprep.subr.mxu0 %v367
    %397 = vmatpush1.msra.mxu0 %v366
    %398 = vmatprep.subr.mxu0 %v364
    %399 = vmatpush1.msra.mxu0 %v363
    %400 = vmatprep.subr.mxu0 %v361
    %401 = vmatpush1.msra.mxu0 %v360
    %402 = vmatprep.subr.mxu0 %v358
    %403 = vmatpush1.msra.mxu0 %v357
    %404 = vmatprep.subr.mxu0 %v355
    %405 = vmatpush1.msra.mxu0 %v354
    %406 = vmatprep.subr.mxu0 %v352
    %407 = vmatpush1.msra.mxu0 %v351
    %408 = vmatprep.subr.mxu0 %v349
    %409 = vmatpush1.msra.mxu0 %v348
    %410 = vmatprep.subr.mxu0 %v346
    %411 = vmatpush1.msra.mxu0 %v345
    %412 = vmatprep.subr.mxu0 %v343
    %413 = vmatpush1.msra.mxu0 %v342
    %414 = vmatprep.subr.mxu0 %v340
    %415 = vmatpush1.msra.mxu0 %v339
    %416 = vmatprep.subr.mxu0 %v337
    %417 = vmatpush1.msra.mxu0 %v336
    %418 = vmatprep.subr.mxu0 %v334
    %419 = vmatpush1.msra.mxu0 %v333
    %420 = vmatprep.subr.mxu0 %v331
    %421 = vmatpush1.msra.mxu0 %v330
    %422 = vmatprep.subr.mxu0 %v328
    %423 = vmatpush1.msra.mxu0 %v327
    %424 = vmatprep.subr.mxu0 0.0
    %425 = vmatpush2.msra.mxu0 0.0
    %426 = vmatprep.subr.mxu0 0.0
    %427 = vmatpush2.msra.mxu0 0.0
    %428 = vmatprep.subr.mxu0 0.0
    %429 = vmatpush2.msra.mxu0 0.0
    %430 = vmatprep.subr.mxu0 0.0
    %431 = vmatpush2.msra.mxu0 0.0
    %432 = vmatprep.subr.mxu0 0.0
    %433 = vmatpush2.msra.mxu0 0.0
    %434 = vmatprep.subr.mxu0 0.0
    %435 = vmatpush2.msra.mxu0 0.0
    %436 = vmatprep.subr.mxu0 0.0
    %437 = vmatpush2.msra.mxu0 0.0
    %438 = vmatprep.subr.mxu0 0.0
    %439 = vmatpush2.msra.mxu0 0.0
    %440 = vmatprep.subr.mxu0 0.0
    %441 = vmatpush2.msra.mxu0 0.0
    %442 = vmatprep.subr.mxu0 0.0
    %443 = vmatpush2.msra.mxu0 0.0
    %444 = vmatprep.subr.mxu0 0.0
    %445 = vmatpush2.msra.mxu0 0.0
    %446 = vmatprep.subr.mxu0 0.0
    %447 = vmatpush2.msra.mxu0 0.0
    %448 = vmatprep.subr.mxu0 0.0
    %449 = vmatpush2.msra.mxu0 0.0
    %450 = vmatprep.subr.mxu0 0.0
    %451 = vmatpush2.msra.mxu0 0.0
    %452 = vmatprep.subr.mxu0 0.0
    %453 = vmatpush2.msra.mxu0 0.0
    %454 = vmatprep.subr.mxu0 0.0
    %455 = vmatpush2.msra.mxu0 0.0
    %456 = vmatprep.mubr.f32.mxu0 0.0
    %457 = vmatmul.mubr.f32.gmra.mxu0 %v325
    %v458 = vpop.f32.mrf.mxu0
    %v459 = vadd.f32 %v380, %v458
    %v460 = vpop.f32.mrf.mxu0
    %v461 = vadd.f32 %v384, %v460
    %462 = vdwg.mxu0
    %463 = vmatprep.subr.mxu0 0.0
    %464 = vmatpush1.msra.mxu0 %v374
    %465 = vmatprep.subr.mxu0 0.0
    %466 = vmatpush1.msra.mxu0 %v371
    %467 = vmatprep.subr.mxu0 0.0
    %468 = vmatpush1.msra.mxu0 %v368
    %469 = vmatprep.subr.mxu0 0.0
    %470 = vmatpush1.msra.mxu0 %v365
    %471 = vmatprep.subr.mxu0 0.0
    %472 = vmatpush1.msra.mxu0 %v362
    %473 = vmatprep.subr.mxu0 0.0
    %474 = vmatpush1.msra.mxu0 %v359
    %475 = vmatprep.subr.mxu0 0.0
    %476 = vmatpush1.msra.mxu0 %v356
    %477 = vmatprep.subr.mxu0 0.0
    %478 = vmatpush1.msra.mxu0 %v353
    %479 = vmatprep.subr.mxu0 0.0
    %480 = vmatpush1.msra.mxu0 %v350
    %481 = vmatprep.subr.mxu0 0.0
    %482 = vmatpush1.msra.mxu0 %v347
    %483 = vmatprep.subr.mxu0 0.0
    %484 = vmatpush1.msra.mxu0 %v344
    %485 = vmatprep.subr.mxu0 0.0
    %486 = vmatpush1.msra.mxu0 %v341
    %487 = vmatprep.subr.mxu0 0.0
    %488 = vmatpush1.msra.mxu0 %v338
    %489 = vmatprep.subr.mxu0 0.0
    %490 = vmatpush1.msra.mxu0 %v335
    %491 = vmatprep.subr.mxu0 0.0
    %492 = vmatpush1.msra.mxu0 %v332
    %493 = vmatprep.subr.mxu0 0.0
    %494 = vmatpush1.msra.mxu0 %v329
    %495 = vmatprep.subr.mxu0 0.0
    %496 = vmatpush2.msra.mxu0 0.0
    %497 = vmatprep.subr.mxu0 0.0
    %498 = vmatpush2.msra.mxu0 0.0
    %499 = vmatprep.subr.mxu0 0.0
    %500 = vmatpush2.msra.mxu0 0.0
    %501 = vmatprep.subr.mxu0 0.0
    %502 = vmatpush2.msra.mxu0 0.0
    %503 = vmatprep.subr.mxu0 0.0
    %504 = vmatpush2.msra.mxu0 0.0
    %505 = vmatprep.subr.mxu0 0.0
    %506 = vmatpush2.msra.mxu0 0.0
    %507 = vmatprep.subr.mxu0 0.0
    %508 = vmatpush2.msra.mxu0 0.0
    %509 = vmatprep.subr.mxu0 0.0
    %510 = vmatpush2.msra.mxu0 0.0
    %511 = vmatprep.subr.mxu0 0.0
    %512 = vmatpush2.msra.mxu0 0.0
    %513 = vmatprep.subr.mxu0 0.0
    %514 = vmatpush2.msra.mxu0 0.0
    %515 = vmatprep.subr.mxu0 0.0
    %516 = vmatpush2.msra.mxu0 0.0
    %517 = vmatprep.subr.mxu0 0.0
    %518 = vmatpush2.msra.mxu0 0.0
    %519 = vmatprep.subr.mxu0 0.0
    %520 = vmatpush2.msra.mxu0 0.0
    %521 = vmatprep.subr.mxu0 0.0
    %522 = vmatpush2.msra.mxu0 0.0
    %523 = vmatprep.subr.mxu0 0.0
    %524 = vmatpush2.msra.mxu0 0.0
    %525 = vmatprep.subr.mxu0 0.0
    %526 = vmatpush2.msra.mxu0 0.0
    %527 = vmatprep.mubr.f32.mxu0 0.0
    %528 = vmatmul.mubr.f32.gmra.mxu0 %v325
    %v529 = vpop.f32.mrf.mxu0
    %v530 = vadd.f32 %v388, %v529
    %v531 = vpop.f32.mrf.mxu0
    %532 = vdwg.mxu0
    %v533 = vadd.f32 %v326, %v459
    %v534 = vxor.u32 %v533, 2147483648
    %v535 = vmul.f32 %v534, 1.442695
    %v536 = vpow.pop %v535
    %v537 = vadd.f32 %v536, 1.0
    %v538 = vrcp.pop %v537
    %v539 = vmul.f32 1.0, %v538
    %v541 = vrot.slane %v326, 1
    %v543 = vadd.f32 %v541, %v461
    %v544 = vxor.u32 %v543, 2147483648
    %v545 = vmul.f32 %v544, 1.442695
    %v546 = vpow.pop %v545
    %v547 = vadd.f32 %v546, 1.0
    %v548 = vrcp.pop %v547
    %v549 = vmul.f32 1.0, %v548
    %v550 = vmul.f32 %v539, %v530
    %v551 = vrot.slane %v326, 2
    %v553 = vadd.f32 %v551, %v550
    %v554 = vtanh.pop %v553
    %v555 = vsub.f32 1.0, %v549
    %v556 = vmul.f32 %v555, %v554
    %v557 = vmul.f32 %v549, %v325
    %v558 = vadd.f32 %v556, %v557
    %559 = vst [vmem:[%s7] sm:$0x1] %v558
    %s560 = scalar_lea.vmem [#allocation3], 1
    %v561 = vld [vmem:[%s560] ss:$8 sm:$0x7]
    %v562 = vld [vmem:[#allocation10] sm:$0xff]
    %v563 = vld [vmem:[#allocation10 + $0x8] sm:$0xff]
    %v564 = vld [vmem:[#allocation10 + $0x10] sm:$0xff]
    %v565 = vld [vmem:[#allocation10 + $0x18] sm:$0xff]
    %v566 = vld [vmem:[#allocation10 + $0x20] sm:$0xff]
    %v567 = vld [vmem:[#allocation10 + $0x28] sm:$0xff]
    %v568 = vld [vmem:[#allocation10 + $0x30] sm:$0xff]
    %v569 = vld [vmem:[#allocation10 + $0x38] sm:$0xff]
    %v570 = vld [vmem:[#allocation10 + $0x40] sm:$0xff]
    %v571 = vld [vmem:[#allocation10 + $0x48] sm:$0xff]
    %v572 = vld [vmem:[#allocation10 + $0x50] sm:$0xff]
    %v573 = vld [vmem:[#allocation10 + $0x58] sm:$0xff]
    %v574 = vld [vmem:[#allocation10 + $0x60] sm:$0xff]
    %v575 = vld [vmem:[#allocation10 + $0x68] sm:$0xff]
    %v576 = vld [vmem:[#allocation10 + $0x70] sm:$0xff]
    %v577 = vld [vmem:[#allocation10 + $0x78] sm:$0xff]
    %v578 = vld [vmem:[#allocation10 + $0x80] sm:$0xff]
    %v579 = vld [vmem:[#allocation10 + $0x88] sm:$0xff]
    %v580 = vld [vmem:[#allocation10 + $0x90] sm:$0xff]
    %v581 = vld [vmem:[#allocation10 + $0x98] sm:$0xff]
    %v582 = vld [vmem:[#allocation10 + $0xa0] sm:$0xff]
    %v583 = vld [vmem:[#allocation10 + $0xa8] sm:$0xff]
    %v584 = vld [vmem:[#allocation10 + $0xb0] sm:$0xff]
    %v585 = vld [vmem:[#allocation10 + $0xb8] sm:$0xff]
    %v586 = vld [vmem:[#allocation10 + $0xc0] sm:$0xff]
    %v587 = vld [vmem:[#allocation10 + $0xc8] sm:$0xff]
    %v588 = vld [vmem:[#allocation10 + $0xd0] sm:$0xff]
    %v589 = vld [vmem:[#allocation10 + $0xd8] sm:$0xff]
    %v590 = vld [vmem:[#allocation10 + $0xe0] sm:$0xff]
    %v591 = vld [vmem:[#allocation10 + $0xe8] sm:$0xff]
    %v592 = vld [vmem:[#allocation10 + $0xf0] sm:$0xff]
    %v593 = vld [vmem:[#allocation10 + $0xf8] sm:$0xff]
    %v594 = vld [vmem:[#allocation10 + $0x100] sm:$0xff]
    %v595 = vld [vmem:[#allocation10 + $0x108] sm:$0xff]
    %v596 = vld [vmem:[#allocation10 + $0x110] sm:$0xff]
    %v597 = vld [vmem:[#allocation10 + $0x118] sm:$0xff]
    %v598 = vld [vmem:[#allocation10 + $0x120] sm:$0xff]
    %v599 = vld [vmem:[#allocation10 + $0x128] sm:$0xff]
    %v600 = vld [vmem:[#allocation10 + $0x130] sm:$0xff]
    %v601 = vld [vmem:[#allocation10 + $0x138] sm:$0xff]
    %v602 = vld [vmem:[#allocation10 + $0x140] sm:$0xff]
    %v603 = vld [vmem:[#allocation10 + $0x148] sm:$0xff]
    %v604 = vld [vmem:[#allocation10 + $0x150] sm:$0xff]
    %v605 = vld [vmem:[#allocation10 + $0x158] sm:$0xff]
    %v606 = vld [vmem:[#allocation10 + $0x160] sm:$0xff]
    %v607 = vld [vmem:[#allocation10 + $0x168] sm:$0xff]
    %v608 = vld [vmem:[#allocation10 + $0x170] sm:$0xff]
    %v609 = vld [vmem:[#allocation10 + $0x178] sm:$0xff]
    %v610 = vld [vmem:[#allocation11] sm:$0x7]
    %v612 = vlaneseq
    %v613 = vshrl.u32 %v612, 7
    %v614 = vsub.s32 0, %v613
    %v615 = vrot.slane %v610, %v614
    %v616 = vlaneseq
    %v617 = vshrl.u32 %v616, 7
    %v618 = vsub.s32 1, %v617
    %v619 = vrot.slane %v610, %v618
    %v620 = vlaneseq
    %v621 = vshrl.u32 %v620, 7
    %v622 = vsub.s32 2, %v621
    %v623 = vrot.slane %v610, %v622
    %627 = vmatprep.subr.mxu0 %v608
    %628 = vmatpush1.msra.mxu0 %v607
    %629 = vmatprep.subr.mxu0 %v605
    %630 = vmatpush1.msra.mxu0 %v604
    %631 = vmatprep.subr.mxu0 %v602
    %632 = vmatpush1.msra.mxu0 %v601
    %633 = vmatprep.subr.mxu0 %v599
    %634 = vmatpush1.msra.mxu0 %v598
    %635 = vmatprep.subr.mxu0 %v596
    %636 = vmatpush1.msra.mxu0 %v595
    %637 = vmatprep.subr.mxu0 %v593
    %638 = vmatpush1.msra.mxu0 %v592
    %639 = vmatprep.subr.mxu0 %v590
    %640 = vmatpush1.msra.mxu0 %v589
    %641 = vmatprep.subr.mxu0 %v587
    %642 = vmatpush1.msra.mxu0 %v586
    %643 = vmatprep.subr.mxu0 %v584
    %644 = vmatpush1.msra.mxu0 %v583
    %645 = vmatprep.subr.mxu0 %v581
    %646 = vmatpush1.msra.mxu0 %v580
    %647 = vmatprep.subr.mxu0 %v578
    %648 = vmatpush1.msra.mxu0 %v577
    %649 = vmatprep.subr.mxu0 %v575
    %650 = vmatpush1.msra.mxu0 %v574
    %651 = vmatprep.subr.mxu0 %v572
    %652 = vmatpush1.msra.mxu0 %v571
    %653 = vmatprep.subr.mxu0 %v569
    %654 = vmatpush1.msra.mxu0 %v568
    %655 = vmatprep.subr.mxu0 %v566
    %656 = vmatpush1.msra.mxu0 %v565
    %657 = vmatprep.subr.mxu0 %v563
    %658 = vmatpush1.msra.mxu0 %v562
    %659 = vmatprep.subr.mxu0 0.0
    %660 = vmatpush2.msra.mxu0 0.0
    %661 = vmatprep.subr.mxu0 0.0
    %662 = vmatpush2.msra.mxu0 0.0
    %663 = vmatprep.subr.mxu0 0.0
    %664 = vmatpush2.msra.mxu0 0.0
    %665 = vmatprep.subr.mxu0 0.0
    %666 = vmatpush2.msra.mxu0 0.0
    %667 = vmatprep.subr.mxu0 0.0
    %668 = vmatpush2.msra.mxu0 0.0
    %669 = vmatprep.subr.mxu0 0.0
    %670 = vmatpush2.msra.mxu0 0.0
    %671 = vmatprep.subr.mxu0 0.0
    %672 = vmatpush2.msra.mxu0 0.0
    %673 = vmatprep.subr.mxu0 0.0
    %674 = vmatpush2.msra.mxu0 0.0
    %675 = vmatprep.subr.mxu0 0.0
    %676 = vmatpush2.msra.mxu0 0.0
    %677 = vmatprep.subr.mxu0 0.0
    %678 = vmatpush2.msra.mxu0 0.0
    %679 = vmatprep.subr.mxu0 0.0
    %680 = vmatpush2.msra.mxu0 0.0
    %681 = vmatprep.subr.mxu0 0.0
    %682 = vmatpush2.msra.mxu0 0.0
    %683 = vmatprep.subr.mxu0 0.0
    %684 = vmatpush2.msra.mxu0 0.0
    %685 = vmatprep.subr.mxu0 0.0
    %686 = vmatpush2.msra.mxu0 0.0
    %687 = vmatprep.subr.mxu0 0.0
    %688 = vmatpush2.msra.mxu0 0.0
    %689 = vmatprep.subr.mxu0 0.0
    %690 = vmatpush2.msra.mxu0 0.0
    %691 = vmatprep.mubr.f32.mxu0 0.0
    %692 = vmatmul.mubr.f32.gmra.mxu0 %v558
    %v693 = vpop.f32.mrf.mxu0
    %v694 = vadd.f32 %v615, %v693
    %v695 = vpop.f32.mrf.mxu0
    %v696 = vadd.f32 %v619, %v695
    %697 = vdwg.mxu0
    %698 = vmatprep.subr.mxu0 0.0
    %699 = vmatpush1.msra.mxu0 %v609
    %700 = vmatprep.subr.mxu0 0.0
    %701 = vmatpush1.msra.mxu0 %v606
    %702 = vmatprep.subr.mxu0 0.0
    %703 = vmatpush1.msra.mxu0 %v603
    %704 = vmatprep.subr.mxu0 0.0
    %705 = vmatpush1.msra.mxu0 %v600
    %706 = vmatprep.subr.mxu0 0.0
    %707 = vmatpush1.msra.mxu0 %v597
    %708 = vmatprep.subr.mxu0 0.0
    %709 = vmatpush1.msra.mxu0 %v594
    %710 = vmatprep.subr.mxu0 0.0
    %711 = vmatpush1.msra.mxu0 %v591
    %712 = vmatprep.subr.mxu0 0.0
    %713 = vmatpush1.msra.mxu0 %v588
    %714 = vmatprep.subr.mxu0 0.0
    %715 = vmatpush1.msra.mxu0 %v585
    %716 = vmatprep.subr.mxu0 0.0
    %717 = vmatpush1.msra.mxu0 %v582
    %718 = vmatprep.subr.mxu0 0.0
    %719 = vmatpush1.msra.mxu0 %v579
    %720 = vmatprep.subr.mxu0 0.0
    %721 = vmatpush1.msra.mxu0 %v576
    %722 = vmatprep.subr.mxu0 0.0
    %723 = vmatpush1.msra.mxu0 %v573
    %724 = vmatprep.subr.mxu0 0.0
    %725 = vmatpush1.msra.mxu0 %v570
    %726 = vmatprep.subr.mxu0 0.0
    %727 = vmatpush1.msra.mxu0 %v567
    %728 = vmatprep.subr.mxu0 0.0
    %729 = vmatpush1.msra.mxu0 %v564
    %730 = vmatprep.subr.mxu0 0.0
    %731 = vmatpush2.msra.mxu0 0.0
    %732 = vmatprep.subr.mxu0 0.0
    %733 = vmatpush2.msra.mxu0 0.0
    %734 = vmatprep.subr.mxu0 0.0
    %735 = vmatpush2.msra.mxu0 0.0
    %736 = vmatprep.subr.mxu0 0.0
    %737 = vmatpush2.msra.mxu0 0.0
    %738 = vmatprep.subr.mxu0 0.0
    %739 = vmatpush2.msra.mxu0 0.0
    %740 = vmatprep.subr.mxu0 0.0
    %741 = vmatpush2.msra.mxu0 0.0
    %742 = vmatprep.subr.mxu0 0.0
    %743 = vmatpush2.msra.mxu0 0.0
    %744 = vmatprep.subr.mxu0 0.0
    %745 = vmatpush2.msra.mxu0 0.0
    %746 = vmatprep.subr.mxu0 0.0
    %747 = vmatpush2.msra.mxu0 0.0
    %748 = vmatprep.subr.mxu0 0.0
    %749 = vmatpush2.msra.mxu0 0.0
    %750 = vmatprep.subr.mxu0 0.0
    %751 = vmatpush2.msra.mxu0 0.0
    %752 = vmatprep.subr.mxu0 0.0
    %753 = vmatpush2.msra.mxu0 0.0
    %754 = vmatprep.subr.mxu0 0.0
    %755 = vmatpush2.msra.mxu0 0.0
    %756 = vmatprep.subr.mxu0 0.0
    %757 = vmatpush2.msra.mxu0 0.0
    %758 = vmatprep.subr.mxu0 0.0
    %759 = vmatpush2.msra.mxu0 0.0
    %760 = vmatprep.subr.mxu0 0.0
    %761 = vmatpush2.msra.mxu0 0.0
    %762 = vmatprep.mubr.f32.mxu0 0.0
    %763 = vmatmul.mubr.f32.gmra.mxu0 %v558
    %v764 = vpop.f32.mrf.mxu0
    %v765 = vadd.f32 %v623, %v764
    %v766 = vpop.f32.mrf.mxu0
    %767 = vdwg.mxu0
    %v768 = vadd.f32 %v561, %v694
    %v769 = vxor.u32 %v768, 2147483648
    %v770 = vmul.f32 %v769, 1.442695
    %v771 = vpow.pop %v770
    %v772 = vadd.f32 %v771, 1.0
    %v773 = vrcp.pop %v772
    %v774 = vmul.f32 1.0, %v773
    %v776 = vrot.slane %v561, 1
    %v778 = vadd.f32 %v776, %v696
    %v779 = vxor.u32 %v778, 2147483648
    %v780 = vmul.f32 %v779, 1.442695
    %v781 = vpow.pop %v780
    %v782 = vadd.f32 %v781, 1.0
    %v783 = vrcp.pop %v782
    %v784 = vmul.f32 1.0, %v783
    %v785 = vmul.f32 %v774, %v765
    %v786 = vrot.slane %v561, 2
    %v788 = vadd.f32 %v786, %v785
    %v789 = vtanh.pop %v788
    %v790 = vsub.f32 1.0, %v784
    %v791 = vmul.f32 %v790, %v789
    %v792 = vmul.f32 %v784, %v558
    %v793 = vadd.f32 %v791, %v792
    %794 = vst [vmem:[%s7 + $0x1] sm:$0x1] %v793
    %s795 = scalar_lea.vmem [#allocation3], 2
    %v796 = vld [vmem:[%s795] ss:$8 sm:$0x7]
    %v797 = vld [vmem:[#allocation10] sm:$0xff]
    %v798 = vld [vmem:[#allocation10 + $0x8] sm:$0xff]
    %v799 = vld [vmem:[#allocation10 + $0x10] sm:$0xff]
    %v800 = vld [vmem:[#allocation10 + $0x18] sm:$0xff]
    %v801 = vld [vmem:[#allocation10 + $0x20] sm:$0xff]
    %v802 = vld [vmem:[#allocation10 + $0x28] sm:$0xff]
    %v803 = vld [vmem:[#allocation10 + $0x30] sm:$0xff]
    %v804 = vld [vmem:[#allocation10 + $0x38] sm:$0xff]
    %v805 = vld [vmem:[#allocation10 + $0x40] sm:$0xff]
    %v806 = vld [vmem:[#allocation10 + $0x48] sm:$0xff]
    %v807 = vld [vmem:[#allocation10 + $0x50] sm:$0xff]
    %v808 = vld [vmem:[#allocation10 + $0x58] sm:$0xff]
    %v809 = vld [vmem:[#allocation10 + $0x60] sm:$0xff]
    %v810 = vld [vmem:[#allocation10 + $0x68] sm:$0xff]
    %v811 = vld [vmem:[#allocation10 + $0x70] sm:$0xff]
    %v812 = vld [vmem:[#allocation10 + $0x78] sm:$0xff]
    %v813 = vld [vmem:[#allocation10 + $0x80] sm:$0xff]
    %v814 = vld [vmem:[#allocation10 + $0x88] sm:$0xff]
    %v815 = vld [vmem:[#allocation10 + $0x90] sm:$0xff]
    %v816 = vld [vmem:[#allocation10 + $0x98] sm:$0xff]
    %v817 = vld [vmem:[#allocation10 + $0xa0] sm:$0xff]
    %v818 = vld [vmem:[#allocation10 + $0xa8] sm:$0xff]
    %v819 = vld [vmem:[#allocation10 + $0xb0] sm:$0xff]
    %v820 = vld [vmem:[#allocation10 + $0xb8] sm:$0xff]
    %v821 = vld [vmem:[#allocation10 + $0xc0] sm:$0xff]
    %v822 = vld [vmem:[#allocation10 + $0xc8] sm:$0xff]
    %v823 = vld [vmem:[#allocation10 + $0xd0] sm:$0xff]
    %v824 = vld [vmem:[#allocation10 + $0xd8] sm:$0xff]
    %v825 = vld [vmem:[#allocation10 + $0xe0] sm:$0xff]
    %v826 = vld [vmem:[#allocation10 + $0xe8] sm:$0xff]
    %v827 = vld [vmem:[#allocation10 + $0xf0] sm:$0xff]
    %v828 = vld [vmem:[#allocation10 + $0xf8] sm:$0xff]
    %v829 = vld [vmem:[#allocation10 + $0x100] sm:$0xff]
    %v830 = vld [vmem:[#allocation10 + $0x108] sm:$0xff]
    %v831 = vld [vmem:[#allocation10 + $0x110] sm:$0xff]
    %v832 = vld [vmem:[#allocation10 + $0x118] sm:$0xff]
    %v833 = vld [vmem:[#allocation10 + $0x120] sm:$0xff]
    %v834 = vld [vmem:[#allocation10 + $0x128] sm:$0xff]
    %v835 = vld [vmem:[#allocation10 + $0x130] sm:$0xff]
    %v836 = vld [vmem:[#allocation10 + $0x138] sm:$0xff]
    %v837 = vld [vmem:[#allocation10 + $0x140] sm:$0xff]
    %v838 = vld [vmem:[#allocation10 + $0x148] sm:$0xff]
    %v839 = vld [vmem:[#allocation10 + $0x150] sm:$0xff]
    %v840 = vld [vmem:[#allocation10 + $0x158] sm:$0xff]
    %v841 = vld [vmem:[#allocation10 + $0x160] sm:$0xff]
    %v842 = vld [vmem:[#allocation10 + $0x168] sm:$0xff]
    %v843 = vld [vmem:[#allocation10 + $0x170] sm:$0xff]
    %v844 = vld [vmem:[#allocation10 + $0x178] sm:$0xff]
    %v845 = vld [vmem:[#allocation11] sm:$0x7]
    %v847 = vlaneseq
    %v848 = vshrl.u32 %v847, 7
    %v849 = vsub.s32 0, %v848
    %v850 = vrot.slane %v845, %v849
    %v851 = vlaneseq
    %v852 = vshrl.u32 %v851, 7
    %v853 = vsub.s32 1, %v852
    %v854 = vrot.slane %v845, %v853
    %v855 = vlaneseq
    %v856 = vshrl.u32 %v855, 7
    %v857 = vsub.s32 2, %v856
    %v858 = vrot.slane %v845, %v857
    %862 = vmatprep.subr.mxu0 %v843
    %863 = vmatpush1.msra.mxu0 %v842
    %864 = vmatprep.subr.mxu0 %v840
    %865 = vmatpush1.msra.mxu0 %v839
    %866 = vmatprep.subr.mxu0 %v837
    %867 = vmatpush1.msra.mxu0 %v836
    %868 = vmatprep.subr.mxu0 %v834
    %869 = vmatpush1.msra.mxu0 %v833
    %870 = vmatprep.subr.mxu0 %v831
    %871 = vmatpush1.msra.mxu0 %v830
    %872 = vmatprep.subr.mxu0 %v828
    %873 = vmatpush1.msra.mxu0 %v827
    %874 = vmatprep.subr.mxu0 %v825
    %875 = vmatpush1.msra.mxu0 %v824
    %876 = vmatprep.subr.mxu0 %v822
    %877 = vmatpush1.msra.mxu0 %v821
    %878 = vmatprep.subr.mxu0 %v819
    %879 = vmatpush1.msra.mxu0 %v818
    %880 = vmatprep.subr.mxu0 %v816
    %881 = vmatpush1.msra.mxu0 %v815
    %882 = vmatprep.subr.mxu0 %v813
    %883 = vmatpush1.msra.mxu0 %v812
    %884 = vmatprep.subr.mxu0 %v810
    %885 = vmatpush1.msra.mxu0 %v809
    %886 = vmatprep.subr.mxu0 %v807
    %887 = vmatpush1.msra.mxu0 %v806
    %888 = vmatprep.subr.mxu0 %v804
    %889 = vmatpush1.msra.mxu0 %v803
    %890 = vmatprep.subr.mxu0 %v801
    %891 = vmatpush1.msra.mxu0 %v800
    %892 = vmatprep.subr.mxu0 %v798
    %893 = vmatpush1.msra.mxu0 %v797
    %894 = vmatprep.subr.mxu0 0.0
    %895 = vmatpush2.msra.mxu0 0.0
    %896 = vmatprep.subr.mxu0 0.0
    %897 = vmatpush2.msra.mxu0 0.0
    %898 = vmatprep.subr.mxu0 0.0
    %899 = vmatpush2.msra.mxu0 0.0
    %900 = vmatprep.subr.mxu0 0.0
    %901 = vmatpush2.msra.mxu0 0.0
    %902 = vmatprep.subr.mxu0 0.0
    %903 = vmatpush2.msra.mxu0 0.0
    %904 = vmatprep.subr.mxu0 0.0
    %905 = vmatpush2.msra.mxu0 0.0
    %906 = vmatprep.subr.mxu0 0.0
    %907 = vmatpush2.msra.mxu0 0.0
    %908 = vmatprep.subr.mxu0 0.0
    %909 = vmatpush2.msra.mxu0 0.0
    %910 = vmatprep.subr.mxu0 0.0
    %911 = vmatpush2.msra.mxu0 0.0
    %912 = vmatprep.subr.mxu0 0.0
    %913 = vmatpush2.msra.mxu0 0.0
    %914 = vmatprep.subr.mxu0 0.0
    %915 = vmatpush2.msra.mxu0 0.0
    %916 = vmatprep.subr.mxu0 0.0
    %917 = vmatpush2.msra.mxu0 0.0
    %918 = vmatprep.subr.mxu0 0.0
    %919 = vmatpush2.msra.mxu0 0.0
    %920 = vmatprep.subr.mxu0 0.0
    %921 = vmatpush2.msra.mxu0 0.0
    %922 = vmatprep.subr.mxu0 0.0
    %923 = vmatpush2.msra.mxu0 0.0
    %924 = vmatprep.subr.mxu0 0.0
    %925 = vmatpush2.msra.mxu0 0.0
    %926 = vmatprep.mubr.f32.mxu0 0.0
    %927 = vmatmul.mubr.f32.gmra.mxu0 %v793
    %v928 = vpop.f32.mrf.mxu0
    %v929 = vadd.f32 %v850, %v928
    %v930 = vpop.f32.mrf.mxu0
    %v931 = vadd.f32 %v854, %v930
    %932 = vdwg.mxu0
    %933 = vmatprep.subr.mxu0 0.0
    %934 = vmatpush1.msra.mxu0 %v844
    %935 = vmatprep.subr.mxu0 0.0
    %936 = vmatpush1.msra.mxu0 %v841
    %937 = vmatprep.subr.mxu0 0.0
    %938 = vmatpush1.msra.mxu0 %v838
    %939 = vmatprep.subr.mxu0 0.0
    %940 = vmatpush1.msra.mxu0 %v835
    %941 = vmatprep.subr.mxu0 0.0
    %942 = vmatpush1.msra.mxu0 %v832
    %943 = vmatprep.subr.mxu0 0.0
    %944 = vmatpush1.msra.mxu0 %v829
    %945 = vmatprep.subr.mxu0 0.0
    %946 = vmatpush1.msra.mxu0 %v826
    %947 = vmatprep.subr.mxu0 0.0
    %948 = vmatpush1.msra.mxu0 %v823
    %949 = vmatprep.subr.mxu0 0.0
    %950 = vmatpush1.msra.mxu0 %v820
    %951 = vmatprep.subr.mxu0 0.0
    %952 = vmatpush1.msra.mxu0 %v817
    %953 = vmatprep.subr.mxu0 0.0
    %954 = vmatpush1.msra.mxu0 %v814
    %955 = vmatprep.subr.mxu0 0.0
    %956 = vmatpush1.msra.mxu0 %v811
    %957 = vmatprep.subr.mxu0 0.0
    %958 = vmatpush1.msra.mxu0 %v808
    %959 = vmatprep.subr.mxu0 0.0
    %960 = vmatpush1.msra.mxu0 %v805
    %961 = vmatprep.subr.mxu0 0.0
    %962 = vmatpush1.msra.mxu0 %v802
    %963 = vmatprep.subr.mxu0 0.0
    %964 = vmatpush1.msra.mxu0 %v799
    %965 = vmatprep.subr.mxu0 0.0
    %966 = vmatpush2.msra.mxu0 0.0
    %967 = vmatprep.subr.mxu0 0.0
    %968 = vmatpush2.msra.mxu0 0.0
    %969 = vmatprep.subr.mxu0 0.0
    %970 = vmatpush2.msra.mxu0 0.0
    %971 = vmatprep.subr.mxu0 0.0
    %972 = vmatpush2.msra.mxu0 0.0
    %973 = vmatprep.subr.mxu0 0.0
    %974 = vmatpush2.msra.mxu0 0.0
    %975 = vmatprep.subr.mxu0 0.0
    %976 = vmatpush2.msra.mxu0 0.0
    %977 = vmatprep.subr.mxu0 0.0
    %978 = vmatpush2.msra.mxu0 0.0
    %979 = vmatprep.subr.mxu0 0.0
    %980 = vmatpush2.msra.mxu0 0.0
    %981 = vmatprep.subr.mxu0 0.0
    %982 = vmatpush2.msra.mxu0 0.0
    %983 = vmatprep.subr.mxu0 0.0
    %984 = vmatpush2.msra.mxu0 0.0
    %985 = vmatprep.subr.mxu0 0.0
    %986 = vmatpush2.msra.mxu0 0.0
    %987 = vmatprep.subr.mxu0 0.0
    %988 = vmatpush2.msra.mxu0 0.0
    %989 = vmatprep.subr.mxu0 0.0
    %990 = vmatpush2.msra.mxu0 0.0
    %991 = vmatprep.subr.mxu0 0.0
    %992 = vmatpush2.msra.mxu0 0.0
    %993 = vmatprep.subr.mxu0 0.0
    %994 = vmatpush2.msra.mxu0 0.0
    %995 = vmatprep.subr.mxu0 0.0
    %996 = vmatpush2.msra.mxu0 0.0
    %997 = vmatprep.mubr.f32.mxu0 0.0
    %998 = vmatmul.mubr.f32.gmra.mxu0 %v793
    %v999 = vpop.f32.mrf.mxu0
    %v1000 = vadd.f32 %v858, %v999
    %v1001 = vpop.f32.mrf.mxu0
    %1002 = vdwg.mxu0
    %v1003 = vadd.f32 %v796, %v929
    %v1004 = vxor.u32 %v1003, 2147483648
    %v1005 = vmul.f32 %v1004, 1.442695
    %v1006 = vpow.pop %v1005
    %v1007 = vadd.f32 %v1006, 1.0
    %v1008 = vrcp.pop %v1007
    %v1009 = vmul.f32 1.0, %v1008
    %v1011 = vrot.slane %v796, 1
    %v1013 = vadd.f32 %v1011, %v931
    %v1014 = vxor.u32 %v1013, 2147483648
    %v1015 = vmul.f32 %v1014, 1.442695
    %v1016 = vpow.pop %v1015
    %v1017 = vadd.f32 %v1016, 1.0
    %v1018 = vrcp.pop %v1017
    %v1019 = vmul.f32 1.0, %v1018
    %v1020 = vmul.f32 %v1009, %v1000
    %v1021 = vrot.slane %v796, 2
    %v1023 = vadd.f32 %v1021, %v1020
    %v1024 = vtanh.pop %v1023
    %v1025 = vsub.f32 1.0, %v1019
    %v1026 = vmul.f32 %v1025, %v1024
    %v1027 = vmul.f32 %v1019, %v793
    %v1028 = vadd.f32 %v1026, %v1027
    %1029 = vst [vmem:[%s7 + $0x2] sm:$0x1] %v1028
    %s1030 = scalar_lea.vmem [#allocation3], 3
    %v1031 = vld [vmem:[%s1030] ss:$8 sm:$0x7]
    %v1032 = vld [vmem:[#allocation10] sm:$0xff]
    %v1033 = vld [vmem:[#allocation10 + $0x8] sm:$0xff]
    %v1034 = vld [vmem:[#allocation10 + $0x10] sm:$0xff]
    %v1035 = vld [vmem:[#allocation10 + $0x18] sm:$0xff]
    %v1036 = vld [vmem:[#allocation10 + $0x20] sm:$0xff]
    %v1037 = vld [vmem:[#allocation10 + $0x28] sm:$0xff]
    %v1038 = vld [vmem:[#allocation10 + $0x30] sm:$0xff]
    %v1039 = vld [vmem:[#allocation10 + $0x38] sm:$0xff]
    %v1040 = vld [vmem:[#allocation10 + $0x40] sm:$0xff]
    %v1041 = vld [vmem:[#allocation10 + $0x48] sm:$0xff]
    %v1042 = vld [vmem:[#allocation10 + $0x50] sm:$0xff]
    %v1043 = vld [vmem:[#allocation10 + $0x58] sm:$0xff]
    %v1044 = vld [vmem:[#allocation10 + $0x60] sm:$0xff]
    %v1045 = vld [vmem:[#allocation10 + $0x68] sm:$0xff]
    %v1046 = vld [vmem:[#allocation10 + $0x70] sm:$0xff]
    %v1047 = vld [vmem:[#allocation10 + $0x78] sm:$0xff]
    %v1048 = vld [vmem:[#allocation10 + $0x80] sm:$0xff]
    %v1049 = vld [vmem:[#allocation10 + $0x88] sm:$0xff]
    %v1050 = vld [vmem:[#allocation10 + $0x90] sm:$0xff]
    %v1051 = vld [vmem:[#allocation10 + $0x98] sm:$0xff]
    %v1052 = vld [vmem:[#allocation10 + $0xa0] sm:$0xff]
    %v1053 = vld [vmem:[#allocation10 + $0xa8] sm:$0xff]
    %v1054 = vld [vmem:[#allocation10 + $0xb0] sm:$0xff]
    %v1055 = vld [vmem:[#allocation10 + $0xb8] sm:$0xff]
    %v1056 = vld [vmem:[#allocation10 + $0xc0] sm:$0xff]
    %v1057 = vld [vmem:[#allocation10 + $0xc8] sm:$0xff]
    %v1058 = vld [vmem:[#allocation10 + $0xd0] sm:$0xff]
    %v1059 = vld [vmem:[#allocation10 + $0xd8] sm:$0xff]
    %v1060 = vld [vmem:[#allocation10 + $0xe0] sm:$0xff]
    %v1061 = vld [vmem:[#allocation10 + $0xe8] sm:$0xff]
    %v1062 = vld [vmem:[#allocation10 + $0xf0] sm:$0xff]
    %v1063 = vld [vmem:[#allocation10 + $0xf8] sm:$0xff]
    %v1064 = vld [vmem:[#allocation10 + $0x100] sm:$0xff]
    %v1065 = vld [vmem:[#allocation10 + $0x108] sm:$0xff]
    %v1066 = vld [vmem:[#allocation10 + $0x110] sm:$0xff]
    %v1067 = vld [vmem:[#allocation10 + $0x118] sm:$0xff]
    %v1068 = vld [vmem:[#allocation10 + $0x120] sm:$0xff]
    %v1069 = vld [vmem:[#allocation10 + $0x128] sm:$0xff]
    %v1070 = vld [vmem:[#allocation10 + $0x130] sm:$0xff]
    %v1071 = vld [vmem:[#allocation10 + $0x138] sm:$0xff]
    %v1072 = vld [vmem:[#allocation10 + $0x140] sm:$0xff]
    %v1073 = vld [vmem:[#allocation10 + $0x148] sm:$0xff]
    %v1074 = vld [vmem:[#allocation10 + $0x150] sm:$0xff]
    %v1075 = vld [vmem:[#allocation10 + $0x158] sm:$0xff]
    %v1076 = vld [vmem:[#allocation10 + $0x160] sm:$0xff]
    %v1077 = vld [vmem:[#allocation10 + $0x168] sm:$0xff]
    %v1078 = vld [vmem:[#allocation10 + $0x170] sm:$0xff]
    %v1079 = vld [vmem:[#allocation10 + $0x178] sm:$0xff]
    %v1080 = vld [vmem:[#allocation11] sm:$0x7]
    %v1082 = vlaneseq
    %v1083 = vshrl.u32 %v1082, 7
    %v1084 = vsub.s32 0, %v1083
    %v1085 = vrot.slane %v1080, %v1084
    %v1086 = vlaneseq
    %v1087 = vshrl.u32 %v1086, 7
    %v1088 = vsub.s32 1, %v1087
    %v1089 = vrot.slane %v1080, %v1088
    %v1090 = vlaneseq
    %v1091 = vshrl.u32 %v1090, 7
    %v1092 = vsub.s32 2, %v1091
    %v1093 = vrot.slane %v1080, %v1092
    %1097 = vmatprep.subr.mxu0 %v1078
    %1098 = vmatpush1.msra.mxu0 %v1077
    %1099 = vmatprep.subr.mxu0 %v1075
    %1100 = vmatpush1.msra.mxu0 %v1074
    %1101 = vmatprep.subr.mxu0 %v1072
    %1102 = vmatpush1.msra.mxu0 %v1071
    %1103 = vmatprep.subr.mxu0 %v1069
    %1104 = vmatpush1.msra.mxu0 %v1068
    %1105 = vmatprep.subr.mxu0 %v1066
    %1106 = vmatpush1.msra.mxu0 %v1065
    %1107 = vmatprep.subr.mxu0 %v1063
    %1108 = vmatpush1.msra.mxu0 %v1062
    %1109 = vmatprep.subr.mxu0 %v1060
    %1110 = vmatpush1.msra.mxu0 %v1059
    %1111 = vmatprep.subr.mxu0 %v1057
    %1112 = vmatpush1.msra.mxu0 %v1056
    %1113 = vmatprep.subr.mxu0 %v1054
    %1114 = vmatpush1.msra.mxu0 %v1053
    %1115 = vmatprep.subr.mxu0 %v1051
    %1116 = vmatpush1.msra.mxu0 %v1050
    %1117 = vmatprep.subr.mxu0 %v1048
    %1118 = vmatpush1.msra.mxu0 %v1047
    %1119 = vmatprep.subr.mxu0 %v1045
    %1120 = vmatpush1.msra.mxu0 %v1044
    %1121 = vmatprep.subr.mxu0 %v1042
    %1122 = vmatpush1.msra.mxu0 %v1041
    %1123 = vmatprep.subr.mxu0 %v1039
    %1124 = vmatpush1.msra.mxu0 %v1038
    %1125 = vmatprep.subr.mxu0 %v1036
    %1126 = vmatpush1.msra.mxu0 %v1035
    %1127 = vmatprep.subr.mxu0 %v1033
    %1128 = vmatpush1.msra.mxu0 %v1032
    %1129 = vmatprep.subr.mxu0 0.0
    %1130 = vmatpush2.msra.mxu0 0.0
    %1131 = vmatprep.subr.mxu0 0.0
    %1132 = vmatpush2.msra.mxu0 0.0
    %1133 = vmatprep.subr.mxu0 0.0
    %1134 = vmatpush2.msra.mxu0 0.0
    %1135 = vmatprep.subr.mxu0 0.0
    %1136 = vmatpush2.msra.mxu0 0.0
    %1137 = vmatprep.subr.mxu0 0.0
    %1138 = vmatpush2.msra.mxu0 0.0
    %1139 = vmatprep.subr.mxu0 0.0
    %1140 = vmatpush2.msra.mxu0 0.0
    %1141 = vmatprep.subr.mxu0 0.0
    %1142 = vmatpush2.msra.mxu0 0.0
    %1143 = vmatprep.subr.mxu0 0.0
    %1144 = vmatpush2.msra.mxu0 0.0
    %1145 = vmatprep.subr.mxu0 0.0
    %1146 = vmatpush2.msra.mxu0 0.0
    %1147 = vmatprep.subr.mxu0 0.0
    %1148 = vmatpush2.msra.mxu0 0.0
    %1149 = vmatprep.subr.mxu0 0.0
    %1150 = vmatpush2.msra.mxu0 0.0
    %1151 = vmatprep.subr.mxu0 0.0
    %1152 = vmatpush2.msra.mxu0 0.0
    %1153 = vmatprep.subr.mxu0 0.0
    %1154 = vmatpush2.msra.mxu0 0.0
    %1155 = vmatprep.subr.mxu0 0.0
    %1156 = vmatpush2.msra.mxu0 0.0
    %1157 = vmatprep.subr.mxu0 0.0
    %1158 = vmatpush2.msra.mxu0 0.0
    %1159 = vmatprep.subr.mxu0 0.0
    %1160 = vmatpush2.msra.mxu0 0.0
    %1161 = vmatprep.mubr.f32.mxu0 0.0
    %1162 = vmatmul.mubr.f32.gmra.mxu0 %v1028
    %v1163 = vpop.f32.mrf.mxu0
    %v1164 = vadd.f32 %v1085, %v1163
    %v1165 = vpop.f32.mrf.mxu0
    %v1166 = vadd.f32 %v1089, %v1165
    %1167 = vdwg.mxu0
    %1168 = vmatprep.subr.mxu0 0.0
    %1169 = vmatpush1.msra.mxu0 %v1079
    %1170 = vmatprep.subr.mxu0 0.0
    %1171 = vmatpush1.msra.mxu0 %v1076
    %1172 = vmatprep.subr.mxu0 0.0
    %1173 = vmatpush1.msra.mxu0 %v1073
    %1174 = vmatprep.subr.mxu0 0.0
    %1175 = vmatpush1.msra.mxu0 %v1070
    %1176 = vmatprep.subr.mxu0 0.0
    %1177 = vmatpush1.msra.mxu0 %v1067
    %1178 = vmatprep.subr.mxu0 0.0
    %1179 = vmatpush1.msra.mxu0 %v1064
    %1180 = vmatprep.subr.mxu0 0.0
    %1181 = vmatpush1.msra.mxu0 %v1061
    %1182 = vmatprep.subr.mxu0 0.0
    %1183 = vmatpush1.msra.mxu0 %v1058
    %1184 = vmatprep.subr.mxu0 0.0
    %1185 = vmatpush1.msra.mxu0 %v1055
    %1186 = vmatprep.subr.mxu0 0.0
    %1187 = vmatpush1.msra.mxu0 %v1052
    %1188 = vmatprep.subr.mxu0 0.0
    %1189 = vmatpush1.msra.mxu0 %v1049
    %1190 = vmatprep.subr.mxu0 0.0
    %1191 = vmatpush1.msra.mxu0 %v1046
    %1192 = vmatprep.subr.mxu0 0.0
    %1193 = vmatpush1.msra.mxu0 %v1043
    %1194 = vmatprep.subr.mxu0 0.0
    %1195 = vmatpush1.msra.mxu0 %v1040
    %1196 = vmatprep.subr.mxu0 0.0
    %1197 = vmatpush1.msra.mxu0 %v1037
    %1198 = vmatprep.subr.mxu0 0.0
    %1199 = vmatpush1.msra.mxu0 %v1034
    %1200 = vmatprep.subr.mxu0 0.0
    %1201 = vmatpush2.msra.mxu0 0.0
    %1202 = vmatprep.subr.mxu0 0.0
    %1203 = vmatpush2.msra.mxu0 0.0
    %1204 = vmatprep.subr.mxu0 0.0
    %1205 = vmatpush2.msra.mxu0 0.0
    %1206 = vmatprep.subr.mxu0 0.0
    %1207 = vmatpush2.msra.mxu0 0.0
    %1208 = vmatprep.subr.mxu0 0.0
    %1209 = vmatpush2.msra.mxu0 0.0
    %1210 = vmatprep.subr.mxu0 0.0
    %1211 = vmatpush2.msra.mxu0 0.0
    %1212 = vmatprep.subr.mxu0 0.0
    %1213 = vmatpush2.msra.mxu0 0.0
    %1214 = vmatprep.subr.mxu0 0.0
    %1215 = vmatpush2.msra.mxu0 0.0
    %1216 = vmatprep.subr.mxu0 0.0
    %1217 = vmatpush2.msra.mxu0 0.0
    %1218 = vmatprep.subr.mxu0 0.0
    %1219 = vmatpush2.msra.mxu0 0.0
    %1220 = vmatprep.subr.mxu0 0.0
    %1221 = vmatpush2.msra.mxu0 0.0
    %1222 = vmatprep.subr.mxu0 0.0
    %1223 = vmatpush2.msra.mxu0 0.0
    %1224 = vmatprep.subr.mxu0 0.0
    %1225 = vmatpush2.msra.mxu0 0.0
    %1226 = vmatprep.subr.mxu0 0.0
    %1227 = vmatpush2.msra.mxu0 0.0
    %1228 = vmatprep.subr.mxu0 0.0
    %1229 = vmatpush2.msra.mxu0 0.0
    %1230 = vmatprep.subr.mxu0 0.0
    %1231 = vmatpush2.msra.mxu0 0.0
    %1232 = vmatprep.mubr.f32.mxu0 0.0
    %1233 = vmatmul.mubr.f32.gmra.mxu0 %v1028
    %v1234 = vpop.f32.mrf.mxu0
    %v1235 = vadd.f32 %v1093, %v1234
    %v1236 = vpop.f32.mrf.mxu0
    %1237 = vdwg.mxu0
    %v1238 = vadd.f32 %v1031, %v1164
    %v1239 = vxor.u32 %v1238, 2147483648
    %v1240 = vmul.f32 %v1239, 1.442695
    %v1241 = vpow.pop %v1240
    %v1242 = vadd.f32 %v1241, 1.0
    %v1243 = vrcp.pop %v1242
    %v1244 = vmul.f32 1.0, %v1243
    %v1246 = vrot.slane %v1031, 1
    %v1248 = vadd.f32 %v1246, %v1166
    %v1249 = vxor.u32 %v1248, 2147483648
    %v1250 = vmul.f32 %v1249, 1.442695
    %v1251 = vpow.pop %v1250
    %v1252 = vadd.f32 %v1251, 1.0
    %v1253 = vrcp.pop %v1252
    %v1254 = vmul.f32 1.0, %v1253
    %v1255 = vmul.f32 %v1244, %v1235
    %v1256 = vrot.slane %v1031, 2
    %v1258 = vadd.f32 %v1256, %v1255
    %v1259 = vtanh.pop %v1258
    %v1260 = vsub.f32 1.0, %v1254
    %v1261 = vmul.f32 %v1260, %v1259
    %v1262 = vmul.f32 %v1254, %v1028
    %v1263 = vadd.f32 %v1261, %v1262
    %1264 = vst [vmem:[%s7 + $0x3] sm:$0x1] %v1263
    %s1265 = scalar_lea.vmem [#allocation3], 4
    %v1266 = vld [vmem:[%s1265] ss:$8 sm:$0x7]
    %v1267 = vld [vmem:[#allocation10] sm:$0xff]
    %v1268 = vld [vmem:[#allocation10 + $0x8] sm:$0xff]
    %v1269 = vld [vmem:[#allocation10 + $0x10] sm:$0xff]
    %v1270 = vld [vmem:[#allocation10 + $0x18] sm:$0xff]
    %v1271 = vld [vmem:[#allocation10 + $0x20] sm:$0xff]
    %v1272 = vld [vmem:[#allocation10 + $0x28] sm:$0xff]
    %v1273 = vld [vmem:[#allocation10 + $0x30] sm:$0xff]
    %v1274 = vld [vmem:[#allocation10 + $0x38] sm:$0xff]
    %v1275 = vld [vmem:[#allocation10 + $0x40] sm:$0xff]
    %v1276 = vld [vmem:[#allocation10 + $0x48] sm:$0xff]
    %v1277 = vld [vmem:[#allocation10 + $0x50] sm:$0xff]
    %v1278 = vld [vmem:[#allocation10 + $0x58] sm:$0xff]
    %v1279 = vld [vmem:[#allocation10 + $0x60] sm:$0xff]
    %v1280 = vld [vmem:[#allocation10 + $0x68] sm:$0xff]
    %v1281 = vld [vmem:[#allocation10 + $0x70] sm:$0xff]
    %v1282 = vld [vmem:[#allocation10 + $0x78] sm:$0xff]
    %v1283 = vld [vmem:[#allocation10 + $0x80] sm:$0xff]
    %v1284 = vld [vmem:[#allocation10 + $0x88] sm:$0xff]
    %v1285 = vld [vmem:[#allocation10 + $0x90] sm:$0xff]
    %v1286 = vld [vmem:[#allocation10 + $0x98] sm:$0xff]
    %v1287 = vld [vmem:[#allocation10 + $0xa0] sm:$0xff]
    %v1288 = vld [vmem:[#allocation10 + $0xa8] sm:$0xff]
    %v1289 = vld [vmem:[#allocation10 + $0xb0] sm:$0xff]
    %v1290 = vld [vmem:[#allocation10 + $0xb8] sm:$0xff]
    %v1291 = vld [vmem:[#allocation10 + $0xc0] sm:$0xff]
    %v1292 = vld [vmem:[#allocation10 + $0xc8] sm:$0xff]
    %v1293 = vld [vmem:[#allocation10 + $0xd0] sm:$0xff]
    %v1294 = vld [vmem:[#allocation10 + $0xd8] sm:$0xff]
    %v1295 = vld [vmem:[#allocation10 + $0xe0] sm:$0xff]
    %v1296 = vld [vmem:[#allocation10 + $0xe8] sm:$0xff]
    %v1297 = vld [vmem:[#allocation10 + $0xf0] sm:$0xff]
    %v1298 = vld [vmem:[#allocation10 + $0xf8] sm:$0xff]
    %v1299 = vld [vmem:[#allocation10 + $0x100] sm:$0xff]
    %v1300 = vld [vmem:[#allocation10 + $0x108] sm:$0xff]
    %v1301 = vld [vmem:[#allocation10 + $0x110] sm:$0xff]
    %v1302 = vld [vmem:[#allocation10 + $0x118] sm:$0xff]
    %v1303 = vld [vmem:[#allocation10 + $0x120] sm:$0xff]
    %v1304 = vld [vmem:[#allocation10 + $0x128] sm:$0xff]
    %v1305 = vld [vmem:[#allocation10 + $0x130] sm:$0xff]
    %v1306 = vld [vmem:[#allocation10 + $0x138] sm:$0xff]
    %v1307 = vld [vmem:[#allocation10 + $0x140] sm:$0xff]
    %v1308 = vld [vmem:[#allocation10 + $0x148] sm:$0xff]
    %v1309 = vld [vmem:[#allocation10 + $0x150] sm:$0xff]
    %v1310 = vld [vmem:[#allocation10 + $0x158] sm:$0xff]
    %v1311 = vld [vmem:[#allocation10 + $0x160] sm:$0xff]
    %v1312 = vld [vmem:[#allocation10 + $0x168] sm:$0xff]
    %v1313 = vld [vmem:[#allocation10 + $0x170] sm:$0xff]
    %v1314 = vld [vmem:[#allocation10 + $0x178] sm:$0xff]
    %v1315 = vld [vmem:[#allocation11] sm:$0x7]
    %v1317 = vlaneseq
    %v1318 = vshrl.u32 %v1317, 7
    %v1319 = vsub.s32 0, %v1318
    %v1320 = vrot.slane %v1315, %v1319
    %v1321 = vlaneseq
    %v1322 = vshrl.u32 %v1321, 7
    %v1323 = vsub.s32 1, %v1322
    %v1324 = vrot.slane %v1315, %v1323
    %v1325 = vlaneseq
    %v1326 = vshrl.u32 %v1325, 7
    %v1327 = vsub.s32 2, %v1326
    %v1328 = vrot.slane %v1315, %v1327
    %1332 = vmatprep.subr.mxu0 %v1313
    %1333 = vmatpush1.msra.mxu0 %v1312
    %1334 = vmatprep.subr.mxu0 %v1310
    %1335 = vmatpush1.msra.mxu0 %v1309
    %1336 = vmatprep.subr.mxu0 %v1307
    %1337 = vmatpush1.msra.mxu0 %v1306
    %1338 = vmatprep.subr.mxu0 %v1304
    %1339 = vmatpush1.msra.mxu0 %v1303
    %1340 = vmatprep.subr.mxu0 %v1301
    %1341 = vmatpush1.msra.mxu0 %v1300
    %1342 = vmatprep.subr.mxu0 %v1298
    %1343 = vmatpush1.msra.mxu0 %v1297
    %1344 = vmatprep.subr.mxu0 %v1295
    %1345 = vmatpush1.msra.mxu0 %v1294
    %1346 = vmatprep.subr.mxu0 %v1292
    %1347 = vmatpush1.msra.mxu0 %v1291
    %1348 = vmatprep.subr.mxu0 %v1289
    %1349 = vmatpush1.msra.mxu0 %v1288
    %1350 = vmatprep.subr.mxu0 %v1286
    %1351 = vmatpush1.msra.mxu0 %v1285
    %1352 = vmatprep.subr.mxu0 %v1283
    %1353 = vmatpush1.msra.mxu0 %v1282
    %1354 = vmatprep.subr.mxu0 %v1280
    %1355 = vmatpush1.msra.mxu0 %v1279
    %1356 = vmatprep.subr.mxu0 %v1277
    %1357 = vmatpush1.msra.mxu0 %v1276
    %1358 = vmatprep.subr.mxu0 %v1274
    %1359 = vmatpush1.msra.mxu0 %v1273
    %1360 = vmatprep.subr.mxu0 %v1271
    %1361 = vmatpush1.msra.mxu0 %v1270
    %1362 = vmatprep.subr.mxu0 %v1268
    %1363 = vmatpush1.msra.mxu0 %v1267
    %1364 = vmatprep.subr.mxu0 0.0
    %1365 = vmatpush2.msra.mxu0 0.0
    %1366 = vmatprep.subr.mxu0 0.0
    %1367 = vmatpush2.msra.mxu0 0.0
    %1368 = vmatprep.subr.mxu0 0.0
    %1369 = vmatpush2.msra.mxu0 0.0
    %1370 = vmatprep.subr.mxu0 0.0
    %1371 = vmatpush2.msra.mxu0 0.0
    %1372 = vmatprep.subr.mxu0 0.0
    %1373 = vmatpush2.msra.mxu0 0.0
    %1374 = vmatprep.subr.mxu0 0.0
    %1375 = vmatpush2.msra.mxu0 0.0
    %1376 = vmatprep.subr.mxu0 0.0
    %1377 = vmatpush2.msra.mxu0 0.0
    %1378 = vmatprep.subr.mxu0 0.0
    %1379 = vmatpush2.msra.mxu0 0.0
    %1380 = vmatprep.subr.mxu0 0.0
    %1381 = vmatpush2.msra.mxu0 0.0
    %1382 = vmatprep.subr.mxu0 0.0
    %1383 = vmatpush2.msra.mxu0 0.0
    %1384 = vmatprep.subr.mxu0 0.0
    %1385 = vmatpush2.msra.mxu0 0.0
    %1386 = vmatprep.subr.mxu0 0.0
    %1387 = vmatpush2.msra.mxu0 0.0
    %1388 = vmatprep.subr.mxu0 0.0
    %1389 = vmatpush2.msra.mxu0 0.0
    %1390 = vmatprep.subr.mxu0 0.0
    %1391 = vmatpush2.msra.mxu0 0.0
    %1392 = vmatprep.subr.mxu0 0.0
    %1393 = vmatpush2.msra.mxu0 0.0
    %1394 = vmatprep.subr.mxu0 0.0
    %1395 = vmatpush2.msra.mxu0 0.0
    %1396 = vmatprep.mubr.f32.mxu0 0.0
    %1397 = vmatmul.mubr.f32.gmra.mxu0 %v1263
    %v1398 = vpop.f32.mrf.mxu0
    %v1399 = vadd.f32 %v1320, %v1398
    %v1400 = vpop.f32.mrf.mxu0
    %v1401 = vadd.f32 %v1324, %v1400
    %1402 = vdwg.mxu0
    %1403 = vmatprep.subr.mxu0 0.0
    %1404 = vmatpush1.msra.mxu0 %v1314
    %1405 = vmatprep.subr.mxu0 0.0
    %1406 = vmatpush1.msra.mxu0 %v1311
    %1407 = vmatprep.subr.mxu0 0.0
    %1408 = vmatpush1.msra.mxu0 %v1308
    %1409 = vmatprep.subr.mxu0 0.0
    %1410 = vmatpush1.msra.mxu0 %v1305
    %1411 = vmatprep.subr.mxu0 0.0
    %1412 = vmatpush1.msra.mxu0 %v1302
    %1413 = vmatprep.subr.mxu0 0.0
    %1414 = vmatpush1.msra.mxu0 %v1299
    %1415 = vmatprep.subr.mxu0 0.0
    %1416 = vmatpush1.msra.mxu0 %v1296
    %1417 = vmatprep.subr.mxu0 0.0
    %1418 = vmatpush1.msra.mxu0 %v1293
    %1419 = vmatprep.subr.mxu0 0.0
    %1420 = vmatpush1.msra.mxu0 %v1290
    %1421 = vmatprep.subr.mxu0 0.0
    %1422 = vmatpush1.msra.mxu0 %v1287
    %1423 = vmatprep.subr.mxu0 0.0
    %1424 = vmatpush1.msra.mxu0 %v1284
    %1425 = vmatprep.subr.mxu0 0.0
    %1426 = vmatpush1.msra.mxu0 %v1281
    %1427 = vmatprep.subr.mxu0 0.0
    %1428 = vmatpush1.msra.mxu0 %v1278
    %1429 = vmatprep.subr.mxu0 0.0
    %1430 = vmatpush1.msra.mxu0 %v1275
    %1431 = vmatprep.subr.mxu0 0.0
    %1432 = vmatpush1.msra.mxu0 %v1272
    %1433 = vmatprep.subr.mxu0 0.0
    %1434 = vmatpush1.msra.mxu0 %v1269
    %1435 = vmatprep.subr.mxu0 0.0
    %1436 = vmatpush2.msra.mxu0 0.0
    %1437 = vmatprep.subr.mxu0 0.0
    %1438 = vmatpush2.msra.mxu0 0.0
    %1439 = vmatprep.subr.mxu0 0.0
    %1440 = vmatpush2.msra.mxu0 0.0
    %1441 = vmatprep.subr.mxu0 0.0
    %1442 = vmatpush2.msra.mxu0 0.0
    %1443 = vmatprep.subr.mxu0 0.0
    %1444 = vmatpush2.msra.mxu0 0.0
    %1445 = vmatprep.subr.mxu0 0.0
    %1446 = vmatpush2.msra.mxu0 0.0
    %1447 = vmatprep.subr.mxu0 0.0
    %1448 = vmatpush2.msra.mxu0 0.0
    %1449 = vmatprep.subr.mxu0 0.0
    %1450 = vmatpush2.msra.mxu0 0.0
    %1451 = vmatprep.subr.mxu0 0.0
    %1452 = vmatpush2.msra.mxu0 0.0
    %1453 = vmatprep.subr.mxu0 0.0
    %1454 = vmatpush2.msra.mxu0 0.0
    %1455 = vmatprep.subr.mxu0 0.0
    %1456 = vmatpush2.msra.mxu0 0.0
    %1457 = vmatprep.subr.mxu0 0.0
    %1458 = vmatpush2.msra.mxu0 0.0
    %1459 = vmatprep.subr.mxu0 0.0
    %1460 = vmatpush2.msra.mxu0 0.0
    %1461 = vmatprep.subr.mxu0 0.0
    %1462 = vmatpush2.msra.mxu0 0.0
    %1463 = vmatprep.subr.mxu0 0.0
    %1464 = vmatpush2.msra.mxu0 0.0
    %1465 = vmatprep.subr.mxu0 0.0
    %1466 = vmatpush2.msra.mxu0 0.0
    %1467 = vmatprep.mubr.f32.mxu0 0.0
    %1468 = vmatmul.mubr.f32.gmra.mxu0 %v1263
    %v1469 = vpop.f32.mrf.mxu0
    %v1470 = vadd.f32 %v1328, %v1469
    %v1471 = vpop.f32.mrf.mxu0
    %1472 = vdwg.mxu0
    %v1473 = vadd.f32 %v1266, %v1399
    %v1474 = vxor.u32 %v1473, 2147483648
    %v1475 = vmul.f32 %v1474, 1.442695
    %v1476 = vpow.pop %v1475
    %v1477 = vadd.f32 %v1476, 1.0
    %v1478 = vrcp.pop %v1477
    %v1479 = vmul.f32 1.0, %v1478
    %v1481 = vrot.slane %v1266, 1
    %v1483 = vadd.f32 %v1481, %v1401
    %v1484 = vxor.u32 %v1483, 2147483648
    %v1485 = vmul.f32 %v1484, 1.442695
    %v1486 = vpow.pop %v1485
    %v1487 = vadd.f32 %v1486, 1.0
    %v1488 = vrcp.pop %v1487
    %v1489 = vmul.f32 1.0, %v1488
    %v1490 = vmul.f32 %v1479, %v1470
    %v1491 = vrot.slane %v1266, 2
    %v1493 = vadd.f32 %v1491, %v1490
    %v1494 = vtanh.pop %v1493
    %v1495 = vsub.f32 1.0, %v1489
    %v1496 = vmul.f32 %v1495, %v1494
    %v1497 = vmul.f32 %v1489, %v1263
    %v1498 = vadd.f32 %v1496, %v1497
    %1499 = vst [vmem:[%s7 + $0x4] sm:$0x1] %v1498
    %s1500 = scalar_lea.vmem [#allocation3], 5
    %v1501 = vld [vmem:[%s1500] ss:$8 sm:$0x7]
    %v1502 = vld [vmem:[#allocation10] sm:$0xff]
    %v1503 = vld [vmem:[#allocation10 + $0x8] sm:$0xff]
    %v1504 = vld [vmem:[#allocation10 + $0x10] sm:$0xff]
    %v1505 = vld [vmem:[#allocation10 + $0x18] sm:$0xff]
    %v1506 = vld [vmem:[#allocation10 + $0x20] sm:$0xff]
    %v1507 = vld [vmem:[#allocation10 + $0x28] sm:$0xff]
    %v1508 = vld [vmem:[#allocation10 + $0x30] sm:$0xff]
    %v1509 = vld [vmem:[#allocation10 + $0x38] sm:$0xff]
    %v1510 = vld [vmem:[#allocation10 + $0x40] sm:$0xff]
    %v1511 = vld [vmem:[#allocation10 + $0x48] sm:$0xff]
    %v1512 = vld [vmem:[#allocation10 + $0x50] sm:$0xff]
    %v1513 = vld [vmem:[#allocation10 + $0x58] sm:$0xff]
    %v1514 = vld [vmem:[#allocation10 + $0x60] sm:$0xff]
    %v1515 = vld [vmem:[#allocation10 + $0x68] sm:$0xff]
    %v1516 = vld [vmem:[#allocation10 + $0x70] sm:$0xff]
    %v1517 = vld [vmem:[#allocation10 + $0x78] sm:$0xff]
    %v1518 = vld [vmem:[#allocation10 + $0x80] sm:$0xff]
    %v1519 = vld [vmem:[#allocation10 + $0x88] sm:$0xff]
    %v1520 = vld [vmem:[#allocation10 + $0x90] sm:$0xff]
    %v1521 = vld [vmem:[#allocation10 + $0x98] sm:$0xff]
    %v1522 = vld [vmem:[#allocation10 + $0xa0] sm:$0xff]
    %v1523 = vld [vmem:[#allocation10 + $0xa8] sm:$0xff]
    %v1524 = vld [vmem:[#allocation10 + $0xb0] sm:$0xff]
    %v1525 = vld [vmem:[#allocation10 + $0xb8] sm:$0xff]
    %v1526 = vld [vmem:[#allocation10 + $0xc0] sm:$0xff]
    %v1527 = vld [vmem:[#allocation10 + $0xc8] sm:$0xff]
    %v1528 = vld [vmem:[#allocation10 + $0xd0] sm:$0xff]
    %v1529 = vld [vmem:[#allocation10 + $0xd8] sm:$0xff]
    %v1530 = vld [vmem:[#allocation10 + $0xe0] sm:$0xff]
    %v1531 = vld [vmem:[#allocation10 + $0xe8] sm:$0xff]
    %v1532 = vld [vmem:[#allocation10 + $0xf0] sm:$0xff]
    %v1533 = vld [vmem:[#allocation10 + $0xf8] sm:$0xff]
    %v1534 = vld [vmem:[#allocation10 + $0x100] sm:$0xff]
    %v1535 = vld [vmem:[#allocation10 + $0x108] sm:$0xff]
    %v1536 = vld [vmem:[#allocation10 + $0x110] sm:$0xff]
    %v1537 = vld [vmem:[#allocation10 + $0x118] sm:$0xff]
    %v1538 = vld [vmem:[#allocation10 + $0x120] sm:$0xff]
    %v1539 = vld [vmem:[#allocation10 + $0x128] sm:$0xff]
    %v1540 = vld [vmem:[#allocation10 + $0x130] sm:$0xff]
    %v1541 = vld [vmem:[#allocation10 + $0x138] sm:$0xff]
    %v1542 = vld [vmem:[#allocation10 + $0x140] sm:$0xff]
    %v1543 = vld [vmem:[#allocation10 + $0x148] sm:$0xff]
    %v1544 = vld [vmem:[#allocation10 + $0x150] sm:$0xff]
    %v1545 = vld [vmem:[#allocation10 + $0x158] sm:$0xff]
    %v1546 = vld [vmem:[#allocation10 + $0x160] sm:$0xff]
    %v1547 = vld [vmem:[#allocation10 + $0x168] sm:$0xff]
    %v1548 = vld [vmem:[#allocation10 + $0x170] sm:$0xff]
    %v1549 = vld [vmem:[#allocation10 + $0x178] sm:$0xff]
    %v1550 = vld [vmem:[#allocation11] sm:$0x7]
    %v1552 = vlaneseq
    %v1553 = vshrl.u32 %v1552, 7
    %v1554 = vsub.s32 0, %v1553
    %v1555 = vrot.slane %v1550, %v1554
    %v1556 = vlaneseq
    %v1557 = vshrl.u32 %v1556, 7
    %v1558 = vsub.s32 1, %v1557
    %v1559 = vrot.slane %v1550, %v1558
    %v1560 = vlaneseq
    %v1561 = vshrl.u32 %v1560, 7
    %v1562 = vsub.s32 2, %v1561
    %v1563 = vrot.slane %v1550, %v1562
    %1567 = vmatprep.subr.mxu0 %v1548
    %1568 = vmatpush1.msra.mxu0 %v1547
    %1569 = vmatprep.subr.mxu0 %v1545
    %1570 = vmatpush1.msra.mxu0 %v1544
    %1571 = vmatprep.subr.mxu0 %v1542
    %1572 = vmatpush1.msra.mxu0 %v1541
    %1573 = vmatprep.subr.mxu0 %v1539
    %1574 = vmatpush1.msra.mxu0 %v1538
    %1575 = vmatprep.subr.mxu0 %v1536
    %1576 = vmatpush1.msra.mxu0 %v1535
    %1577 = vmatprep.subr.mxu0 %v1533
    %1578 = vmatpush1.msra.mxu0 %v1532
    %1579 = vmatprep.subr.mxu0 %v1530
    %1580 = vmatpush1.msra.mxu0 %v1529
    %1581 = vmatprep.subr.mxu0 %v1527
    %1582 = vmatpush1.msra.mxu0 %v1526
    %1583 = vmatprep.subr.mxu0 %v1524
    %1584 = vmatpush1.msra.mxu0 %v1523
    %1585 = vmatprep.subr.mxu0 %v1521
    %1586 = vmatpush1.msra.mxu0 %v1520
    %1587 = vmatprep.subr.mxu0 %v1518
    %1588 = vmatpush1.msra.mxu0 %v1517
    %1589 = vmatprep.subr.mxu0 %v1515
    %1590 = vmatpush1.msra.mxu0 %v1514
    %1591 = vmatprep.subr.mxu0 %v1512
    %1592 = vmatpush1.msra.mxu0 %v1511
    %1593 = vmatprep.subr.mxu0 %v1509
    %1594 = vmatpush1.msra.mxu0 %v1508
    %1595 = vmatprep.subr.mxu0 %v1506
    %1596 = vmatpush1.msra.mxu0 %v1505
    %1597 = vmatprep.subr.mxu0 %v1503
    %1598 = vmatpush1.msra.mxu0 %v1502
    %1599 = vmatprep.subr.mxu0 0.0
    %1600 = vmatpush2.msra.mxu0 0.0
    %1601 = vmatprep.subr.mxu0 0.0
    %1602 = vmatpush2.msra.mxu0 0.0
    %1603 = vmatprep.subr.mxu0 0.0
    %1604 = vmatpush2.msra.mxu0 0.0
    %1605 = vmatprep.subr.mxu0 0.0
    %1606 = vmatpush2.msra.mxu0 0.0
    %1607 = vmatprep.subr.mxu0 0.0
    %1608 = vmatpush2.msra.mxu0 0.0
    %1609 = vmatprep.subr.mxu0 0.0
    %1610 = vmatpush2.msra.mxu0 0.0
    %1611 = vmatprep.subr.mxu0 0.0
    %1612 = vmatpush2.msra.mxu0 0.0
    %1613 = vmatprep.subr.mxu0 0.0
    %1614 = vmatpush2.msra.mxu0 0.0
    %1615 = vmatprep.subr.mxu0 0.0
    %1616 = vmatpush2.msra.mxu0 0.0
    %1617 = vmatprep.subr.mxu0 0.0
    %1618 = vmatpush2.msra.mxu0 0.0
    %1619 = vmatprep.subr.mxu0 0.0
    %1620 = vmatpush2.msra.mxu0 0.0
    %1621 = vmatprep.subr.mxu0 0.0
    %1622 = vmatpush2.msra.mxu0 0.0
    %1623 = vmatprep.subr.mxu0 0.0
    %1624 = vmatpush2.msra.mxu0 0.0
    %1625 = vmatprep.subr.mxu0 0.0
    %1626 = vmatpush2.msra.mxu0 0.0
    %1627 = vmatprep.subr.mxu0 0.0
    %1628 = vmatpush2.msra.mxu0 0.0
    %1629 = vmatprep.subr.mxu0 0.0
    %1630 = vmatpush2.msra.mxu0 0.0
    %1631 = vmatprep.mubr.f32.mxu0 0.0
    %1632 = vmatmul.mubr.f32.gmra.mxu0 %v1498
    %v1633 = vpop.f32.mrf.mxu0
    %v1634 = vadd.f32 %v1555, %v1633
    %v1635 = vpop.f32.mrf.mxu0
    %v1636 = vadd.f32 %v1559, %v1635
    %1637 = vdwg.mxu0
    %1638 = vmatprep.subr.mxu0 0.0
    %1639 = vmatpush1.msra.mxu0 %v1549
    %1640 = vmatprep.subr.mxu0 0.0
    %1641 = vmatpush1.msra.mxu0 %v1546
    %1642 = vmatprep.subr.mxu0 0.0
    %1643 = vmatpush1.msra.mxu0 %v1543
    %1644 = vmatprep.subr.mxu0 0.0
    %1645 = vmatpush1.msra.mxu0 %v1540
    %1646 = vmatprep.subr.mxu0 0.0
    %1647 = vmatpush1.msra.mxu0 %v1537
    %1648 = vmatprep.subr.mxu0 0.0
    %1649 = vmatpush1.msra.mxu0 %v1534
    %1650 = vmatprep.subr.mxu0 0.0
    %1651 = vmatpush1.msra.mxu0 %v1531
    %1652 = vmatprep.subr.mxu0 0.0
    %1653 = vmatpush1.msra.mxu0 %v1528
    %1654 = vmatprep.subr.mxu0 0.0
    %1655 = vmatpush1.msra.mxu0 %v1525
    %1656 = vmatprep.subr.mxu0 0.0
    %1657 = vmatpush1.msra.mxu0 %v1522
    %1658 = vmatprep.subr.mxu0 0.0
    %1659 = vmatpush1.msra.mxu0 %v1519
    %1660 = vmatprep.subr.mxu0 0.0
    %1661 = vmatpush1.msra.mxu0 %v1516
    %1662 = vmatprep.subr.mxu0 0.0
    %1663 = vmatpush1.msra.mxu0 %v1513
    %1664 = vmatprep.subr.mxu0 0.0
    %1665 = vmatpush1.msra.mxu0 %v1510
    %1666 = vmatprep.subr.mxu0 0.0
    %1667 = vmatpush1.msra.mxu0 %v1507
    %1668 = vmatprep.subr.mxu0 0.0
    %1669 = vmatpush1.msra.mxu0 %v1504
    %1670 = vmatprep.subr.mxu0 0.0
    %1671 = vmatpush2.msra.mxu0 0.0
    %1672 = vmatprep.subr.mxu0 0.0
    %1673 = vmatpush2.msra.mxu0 0.0
    %1674 = vmatprep.subr.mxu0 0.0
    %1675 = vmatpush2.msra.mxu0 0.0
    %1676 = vmatprep.subr.mxu0 0.0
    %1677 = vmatpush2.msra.mxu0 0.0
    %1678 = vmatprep.subr.mxu0 0.0
    %1679 = vmatpush2.msra.mxu0 0.0
    %1680 = vmatprep.subr.mxu0 0.0
    %1681 = vmatpush2.msra.mxu0 0.0
    %1682 = vmatprep.subr.mxu0 0.0
    %1683 = vmatpush2.msra.mxu0 0.0
    %1684 = vmatprep.subr.mxu0 0.0
    %1685 = vmatpush2.msra.mxu0 0.0
    %1686 = vmatprep.subr.mxu0 0.0
    %1687 = vmatpush2.msra.mxu0 0.0
    %1688 = vmatprep.subr.mxu0 0.0
    %1689 = vmatpush2.msra.mxu0 0.0
    %1690 = vmatprep.subr.mxu0 0.0
    %1691 = vmatpush2.msra.mxu0 0.0
    %1692 = vmatprep.subr.mxu0 0.0
    %1693 = vmatpush2.msra.mxu0 0.0
    %1694 = vmatprep.subr.mxu0 0.0
    %1695 = vmatpush2.msra.mxu0 0.0
    %1696 = vmatprep.subr.mxu0 0.0
    %1697 = vmatpush2.msra.mxu0 0.0
    %1698 = vmatprep.subr.mxu0 0.0
    %1699 = vmatpush2.msra.mxu0 0.0
    %1700 = vmatprep.subr.mxu0 0.0
    %1701 = vmatpush2.msra.mxu0 0.0
    %1702 = vmatprep.mubr.f32.mxu0 0.0
    %1703 = vmatmul.mubr.f32.gmra.mxu0 %v1498
    %v1704 = vpop.f32.mrf.mxu0
    %v1705 = vadd.f32 %v1563, %v1704
    %v1706 = vpop.f32.mrf.mxu0
    %1707 = vdwg.mxu0
    %v1708 = vadd.f32 %v1501, %v1634
    %v1709 = vxor.u32 %v1708, 2147483648
    %v1710 = vmul.f32 %v1709, 1.442695
    %v1711 = vpow.pop %v1710
    %v1712 = vadd.f32 %v1711, 1.0
    %v1713 = vrcp.pop %v1712
    %v1714 = vmul.f32 1.0, %v1713
    %v1716 = vrot.slane %v1501, 1
    %v1718 = vadd.f32 %v1716, %v1636
    %v1719 = vxor.u32 %v1718, 2147483648
    %v1720 = vmul.f32 %v1719, 1.442695
    %v1721 = vpow.pop %v1720
    %v1722 = vadd.f32 %v1721, 1.0
    %v1723 = vrcp.pop %v1722
    %v1724 = vmul.f32 1.0, %v1723
    %v1725 = vmul.f32 %v1714, %v1705
    %v1726 = vrot.slane %v1501, 2
    %v1728 = vadd.f32 %v1726, %v1725
    %v1729 = vtanh.pop %v1728
    %v1730 = vsub.f32 1.0, %v1724
    %v1731 = vmul.f32 %v1730, %v1729
    %v1732 = vmul.f32 %v1724, %v1498
    %v1733 = vadd.f32 %v1731, %v1732
    %1734 = vst [vmem:[%s7 + $0x5] sm:$0x1] %v1733
    %s1735 = scalar_lea.vmem [#allocation3], 6
    %v1736 = vld [vmem:[%s1735] ss:$8 sm:$0x7]
    %v1737 = vld [vmem:[#allocation10] sm:$0xff]
    %v1738 = vld [vmem:[#allocation10 + $0x8] sm:$0xff]
    %v1739 = vld [vmem:[#allocation10 + $0x10] sm:$0xff]
    %v1740 = vld [vmem:[#allocation10 + $0x18] sm:$0xff]
    %v1741 = vld [vmem:[#allocation10 + $0x20] sm:$0xff]
    %v1742 = vld [vmem:[#allocation10 + $0x28] sm:$0xff]
    %v1743 = vld [vmem:[#allocation10 + $0x30] sm:$0xff]
    %v1744 = vld [vmem:[#allocation10 + $0x38] sm:$0xff]
    %v1745 = vld [vmem:[#allocation10 + $0x40] sm:$0xff]
    %v1746 = vld [vmem:[#allocation10 + $0x48] sm:$0xff]
    %v1747 = vld [vmem:[#allocation10 + $0x50] sm:$0xff]
    %v1748 = vld [vmem:[#allocation10 + $0x58] sm:$0xff]
    %v1749 = vld [vmem:[#allocation10 + $0x60] sm:$0xff]
    %v1750 = vld [vmem:[#allocation10 + $0x68] sm:$0xff]
    %v1751 = vld [vmem:[#allocation10 + $0x70] sm:$0xff]
    %v1752 = vld [vmem:[#allocation10 + $0x78] sm:$0xff]
    %v1753 = vld [vmem:[#allocation10 + $0x80] sm:$0xff]
    %v1754 = vld [vmem:[#allocation10 + $0x88] sm:$0xff]
    %v1755 = vld [vmem:[#allocation10 + $0x90] sm:$0xff]
    %v1756 = vld [vmem:[#allocation10 + $0x98] sm:$0xff]
    %v1757 = vld [vmem:[#allocation10 + $0xa0] sm:$0xff]
    %v1758 = vld [vmem:[#allocation10 + $0xa8] sm:$0xff]
    %v1759 = vld [vmem:[#allocation10 + $0xb0] sm:$0xff]
    %v1760 = vld [vmem:[#allocation10 + $0xb8] sm:$0xff]
    %v1761 = vld [vmem:[#allocation10 + $0xc0] sm:$0xff]
    %v1762 = vld [vmem:[#allocation10 + $0xc8] sm:$0xff]
    %v1763 = vld [vmem:[#allocation10 + $0xd0] sm:$0xff]
    %v1764 = vld [vmem:[#allocation10 + $0xd8] sm:$0xff]
    %v1765 = vld [vmem:[#allocation10 + $0xe0] sm:$0xff]
    %v1766 = vld [vmem:[#allocation10 + $0xe8] sm:$0xff]
    %v1767 = vld [vmem:[#allocation10 + $0xf0] sm:$0xff]
    %v1768 = vld [vmem:[#allocation10 + $0xf8] sm:$0xff]
    %v1769 = vld [vmem:[#allocation10 + $0x100] sm:$0xff]
    %v1770 = vld [vmem:[#allocation10 + $0x108] sm:$0xff]
    %v1771 = vld [vmem:[#allocation10 + $0x110] sm:$0xff]
    %v1772 = vld [vmem:[#allocation10 + $0x118] sm:$0xff]
    %v1773 = vld [vmem:[#allocation10 + $0x120] sm:$0xff]
    %v1774 = vld [vmem:[#allocation10 + $0x128] sm:$0xff]
    %v1775 = vld [vmem:[#allocation10 + $0x130] sm:$0xff]
    %v1776 = vld [vmem:[#allocation10 + $0x138] sm:$0xff]
    %v1777 = vld [vmem:[#allocation10 + $0x140] sm:$0xff]
    %v1778 = vld [vmem:[#allocation10 + $0x148] sm:$0xff]
    %v1779 = vld [vmem:[#allocation10 + $0x150] sm:$0xff]
    %v1780 = vld [vmem:[#allocation10 + $0x158] sm:$0xff]
    %v1781 = vld [vmem:[#allocation10 + $0x160] sm:$0xff]
    %v1782 = vld [vmem:[#allocation10 + $0x168] sm:$0xff]
    %v1783 = vld [vmem:[#allocation10 + $0x170] sm:$0xff]
    %v1784 = vld [vmem:[#allocation10 + $0x178] sm:$0xff]
    %v1785 = vld [vmem:[#allocation11] sm:$0x7]
    %v1787 = vlaneseq
    %v1788 = vshrl.u32 %v1787, 7
    %v1789 = vsub.s32 0, %v1788
    %v1790 = vrot.slane %v1785, %v1789
    %v1791 = vlaneseq
    %v1792 = vshrl.u32 %v1791, 7
    %v1793 = vsub.s32 1, %v1792
    %v1794 = vrot.slane %v1785, %v1793
    %v1795 = vlaneseq
    %v1796 = vshrl.u32 %v1795, 7
    %v1797 = vsub.s32 2, %v1796
    %v1798 = vrot.slane %v1785, %v1797
    %1802 = vmatprep.subr.mxu0 %v1783
    %1803 = vmatpush1.msra.mxu0 %v1782
    %1804 = vmatprep.subr.mxu0 %v1780
    %1805 = vmatpush1.msra.mxu0 %v1779
    %1806 = vmatprep.subr.mxu0 %v1777
    %1807 = vmatpush1.msra.mxu0 %v1776
    %1808 = vmatprep.subr.mxu0 %v1774
    %1809 = vmatpush1.msra.mxu0 %v1773
    %1810 = vmatprep.subr.mxu0 %v1771
    %1811 = vmatpush1.msra.mxu0 %v1770
    %1812 = vmatprep.subr.mxu0 %v1768
    %1813 = vmatpush1.msra.mxu0 %v1767
    %1814 = vmatprep.subr.mxu0 %v1765
    %1815 = vmatpush1.msra.mxu0 %v1764
    %1816 = vmatprep.subr.mxu0 %v1762
    %1817 = vmatpush1.msra.mxu0 %v1761
    %1818 = vmatprep.subr.mxu0 %v1759
    %1819 = vmatpush1.msra.mxu0 %v1758
    %1820 = vmatprep.subr.mxu0 %v1756
    %1821 = vmatpush1.msra.mxu0 %v1755
    %1822 = vmatprep.subr.mxu0 %v1753
    %1823 = vmatpush1.msra.mxu0 %v1752
    %1824 = vmatprep.subr.mxu0 %v1750
    %1825 = vmatpush1.msra.mxu0 %v1749
    %1826 = vmatprep.subr.mxu0 %v1747
    %1827 = vmatpush1.msra.mxu0 %v1746
    %1828 = vmatprep.subr.mxu0 %v1744
    %1829 = vmatpush1.msra.mxu0 %v1743
    %1830 = vmatprep.subr.mxu0 %v1741
    %1831 = vmatpush1.msra.mxu0 %v1740
    %1832 = vmatprep.subr.mxu0 %v1738
    %1833 = vmatpush1.msra.mxu0 %v1737
    %1834 = vmatprep.subr.mxu0 0.0
    %1835 = vmatpush2.msra.mxu0 0.0
    %1836 = vmatprep.subr.mxu0 0.0
    %1837 = vmatpush2.msra.mxu0 0.0
    %1838 = vmatprep.subr.mxu0 0.0
    %1839 = vmatpush2.msra.mxu0 0.0
    %1840 = vmatprep.subr.mxu0 0.0
    %1841 = vmatpush2.msra.mxu0 0.0
    %1842 = vmatprep.subr.mxu0 0.0
    %1843 = vmatpush2.msra.mxu0 0.0
    %1844 = vmatprep.subr.mxu0 0.0
    %1845 = vmatpush2.msra.mxu0 0.0
    %1846 = vmatprep.subr.mxu0 0.0
    %1847 = vmatpush2.msra.mxu0 0.0
    %1848 = vmatprep.subr.mxu0 0.0
    %1849 = vmatpush2.msra.mxu0 0.0
    %1850 = vmatprep.subr.mxu0 0.0
    %1851 = vmatpush2.msra.mxu0 0.0
    %1852 = vmatprep.subr.mxu0 0.0
    %1853 = vmatpush2.msra.mxu0 0.0
    %1854 = vmatprep.subr.mxu0 0.0
    %1855 = vmatpush2.msra.mxu0 0.0
    %1856 = vmatprep.subr.mxu0 0.0
    %1857 = vmatpush2.msra.mxu0 0.0
    %1858 = vmatprep.subr.mxu0 0.0
    %1859 = vmatpush2.msra.mxu0 0.0
    %1860 = vmatprep.subr.mxu0 0.0
    %1861 = vmatpush2.msra.mxu0 0.0
    %1862 = vmatprep.subr.mxu0 0.0
    %1863 = vmatpush2.msra.mxu0 0.0
    %1864 = vmatprep.subr.mxu0 0.0
    %1865 = vmatpush2.msra.mxu0 0.0
    %1866 = vmatprep.mubr.f32.mxu0 0.0
    %1867 = vmatmul.mubr.f32.gmra.mxu0 %v1733
    %v1868 = vpop.f32.mrf.mxu0
    %v1869 = vadd.f32 %v1790, %v1868
    %v1870 = vpop.f32.mrf.mxu0
    %v1871 = vadd.f32 %v1794, %v1870
    %1872 = vdwg.mxu0
    %1873 = vmatprep.subr.mxu0 0.0
    %1874 = vmatpush1.msra.mxu0 %v1784
    %1875 = vmatprep.subr.mxu0 0.0
    %1876 = vmatpush1.msra.mxu0 %v1781
    %1877 = vmatprep.subr.mxu0 0.0
    %1878 = vmatpush1.msra.mxu0 %v1778
    %1879 = vmatprep.subr.mxu0 0.0
    %1880 = vmatpush1.msra.mxu0 %v1775
    %1881 = vmatprep.subr.mxu0 0.0
    %1882 = vmatpush1.msra.mxu0 %v1772
    %1883 = vmatprep.subr.mxu0 0.0
    %1884 = vmatpush1.msra.mxu0 %v1769
    %1885 = vmatprep.subr.mxu0 0.0
    %1886 = vmatpush1.msra.mxu0 %v1766
    %1887 = vmatprep.subr.mxu0 0.0
    %1888 = vmatpush1.msra.mxu0 %v1763
    %1889 = vmatprep.subr.mxu0 0.0
    %1890 = vmatpush1.msra.mxu0 %v1760
    %1891 = vmatprep.subr.mxu0 0.0
    %1892 = vmatpush1.msra.mxu0 %v1757
    %1893 = vmatprep.subr.mxu0 0.0
    %1894 = vmatpush1.msra.mxu0 %v1754
    %1895 = vmatprep.subr.mxu0 0.0
    %1896 = vmatpush1.msra.mxu0 %v1751
    %1897 = vmatprep.subr.mxu0 0.0
    %1898 = vmatpush1.msra.mxu0 %v1748
    %1899 = vmatprep.subr.mxu0 0.0
    %1900 = vmatpush1.msra.mxu0 %v1745
    %1901 = vmatprep.subr.mxu0 0.0
    %1902 = vmatpush1.msra.mxu0 %v1742
    %1903 = vmatprep.subr.mxu0 0.0
    %1904 = vmatpush1.msra.mxu0 %v1739
    %1905 = vmatprep.subr.mxu0 0.0
    %1906 = vmatpush2.msra.mxu0 0.0
    %1907 = vmatprep.subr.mxu0 0.0
    %1908 = vmatpush2.msra.mxu0 0.0
    %1909 = vmatprep.subr.mxu0 0.0
    %1910 = vmatpush2.msra.mxu0 0.0
    %1911 = vmatprep.subr.mxu0 0.0
    %1912 = vmatpush2.msra.mxu0 0.0
    %1913 = vmatprep.subr.mxu0 0.0
    %1914 = vmatpush2.msra.mxu0 0.0
    %1915 = vmatprep.subr.mxu0 0.0
    %1916 = vmatpush2.msra.mxu0 0.0
    %1917 = vmatprep.subr.mxu0 0.0
    %1918 = vmatpush2.msra.mxu0 0.0
    %1919 = vmatprep.subr.mxu0 0.0
    %1920 = vmatpush2.msra.mxu0 0.0
    %1921 = vmatprep.subr.mxu0 0.0
    %1922 = vmatpush2.msra.mxu0 0.0
    %1923 = vmatprep.subr.mxu0 0.0
    %1924 = vmatpush2.msra.mxu0 0.0
    %1925 = vmatprep.subr.mxu0 0.0
    %1926 = vmatpush2.msra.mxu0 0.0
    %1927 = vmatprep.subr.mxu0 0.0
    %1928 = vmatpush2.msra.mxu0 0.0
    %1929 = vmatprep.subr.mxu0 0.0
    %1930 = vmatpush2.msra.mxu0 0.0
    %1931 = vmatprep.subr.mxu0 0.0
    %1932 = vmatpush2.msra.mxu0 0.0
    %1933 = vmatprep.subr.mxu0 0.0
    %1934 = vmatpush2.msra.mxu0 0.0
    %1935 = vmatprep.subr.mxu0 0.0
    %1936 = vmatpush2.msra.mxu0 0.0
    %1937 = vmatprep.mubr.f32.mxu0 0.0
    %1938 = vmatmul.mubr.f32.gmra.mxu0 %v1733
    %v1939 = vpop.f32.mrf.mxu0
    %v1940 = vadd.f32 %v1798, %v1939
    %v1941 = vpop.f32.mrf.mxu0
    %1942 = vdwg.mxu0
    %v1943 = vadd.f32 %v1736, %v1869
    %v1944 = vxor.u32 %v1943, 2147483648
    %v1945 = vmul.f32 %v1944, 1.442695
    %v1946 = vpow.pop %v1945
    %v1947 = vadd.f32 %v1946, 1.0
    %v1948 = vrcp.pop %v1947
    %v1949 = vmul.f32 1.0, %v1948
    %v1951 = vrot.slane %v1736, 1
    %v1953 = vadd.f32 %v1951, %v1871
    %v1954 = vxor.u32 %v1953, 2147483648
    %v1955 = vmul.f32 %v1954, 1.442695
    %v1956 = vpow.pop %v1955
    %v1957 = vadd.f32 %v1956, 1.0
    %v1958 = vrcp.pop %v1957
    %v1959 = vmul.f32 1.0, %v1958
    %v1960 = vmul.f32 %v1949, %v1940
    %v1961 = vrot.slane %v1736, 2
    %v1963 = vadd.f32 %v1961, %v1960
    %v1964 = vtanh.pop %v1963
    %v1965 = vsub.f32 1.0, %v1959
    %v1966 = vmul.f32 %v1965, %v1964
    %v1967 = vmul.f32 %v1959, %v1733
    %v1968 = vadd.f32 %v1966, %v1967
    %1969 = vst [vmem:[%s7 + $0x6] sm:$0x1] %v1968
    %s1970 = scalar_lea.vmem [#allocation3], 7
    %v1971 = vld [vmem:[%s1970] ss:$8 sm:$0x7]
    %v1972 = vld [vmem:[#allocation10] sm:$0xff]
    %v1973 = vld [vmem:[#allocation10 + $0x8] sm:$0xff]
    %v1974 = vld [vmem:[#allocation10 + $0x10] sm:$0xff]
    %v1975 = vld [vmem:[#allocation10 + $0x18] sm:$0xff]
    %v1976 = vld [vmem:[#allocation10 + $0x20] sm:$0xff]
    %v1977 = vld [vmem:[#allocation10 + $0x28] sm:$0xff]
    %v1978 = vld [vmem:[#allocation10 + $0x30] sm:$0xff]
    %v1979 = vld [vmem:[#allocation10 + $0x38] sm:$0xff]
    %v1980 = vld [vmem:[#allocation10 + $0x40] sm:$0xff]
    %v1981 = vld [vmem:[#allocation10 + $0x48] sm:$0xff]
    %v1982 = vld [vmem:[#allocation10 + $0x50] sm:$0xff]
    %v1983 = vld [vmem:[#allocation10 + $0x58] sm:$0xff]
    %v1984 = vld [vmem:[#allocation10 + $0x60] sm:$0xff]
    %v1985 = vld [vmem:[#allocation10 + $0x68] sm:$0xff]
    %v1986 = vld [vmem:[#allocation10 + $0x70] sm:$0xff]
    %v1987 = vld [vmem:[#allocation10 + $0x78] sm:$0xff]
    %v1988 = vld [vmem:[#allocation10 + $0x80] sm:$0xff]
    %v1989 = vld [vmem:[#allocation10 + $0x88] sm:$0xff]
    %v1990 = vld [vmem:[#allocation10 + $0x90] sm:$0xff]
    %v1991 = vld [vmem:[#allocation10 + $0x98] sm:$0xff]
    %v1992 = vld [vmem:[#allocation10 + $0xa0] sm:$0xff]
    %v1993 = vld [vmem:[#allocation10 + $0xa8] sm:$0xff]
    %v1994 = vld [vmem:[#allocation10 + $0xb0] sm:$0xff]
    %v1995 = vld [vmem:[#allocation10 + $0xb8] sm:$0xff]
    %v1996 = vld [vmem:[#allocation10 + $0xc0] sm:$0xff]
    %v1997 = vld [vmem:[#allocation10 + $0xc8] sm:$0xff]
    %v1998 = vld [vmem:[#allocation10 + $0xd0] sm:$0xff]
    %v1999 = vld [vmem:[#allocation10 + $0xd8] sm:$0xff]
    %v2000 = vld [vmem:[#allocation10 + $0xe0] sm:$0xff]
    %v2001 = vld [vmem:[#allocation10 + $0xe8] sm:$0xff]
    %v2002 = vld [vmem:[#allocation10 + $0xf0] sm:$0xff]
    %v2003 = vld [vmem:[#allocation10 + $0xf8] sm:$0xff]
    %v2004 = vld [vmem:[#allocation10 + $0x100] sm:$0xff]
    %v2005 = vld [vmem:[#allocation10 + $0x108] sm:$0xff]
    %v2006 = vld [vmem:[#allocation10 + $0x110] sm:$0xff]
    %v2007 = vld [vmem:[#allocation10 + $0x118] sm:$0xff]
    %v2008 = vld [vmem:[#allocation10 + $0x120] sm:$0xff]
    %v2009 = vld [vmem:[#allocation10 + $0x128] sm:$0xff]
    %v2010 = vld [vmem:[#allocation10 + $0x130] sm:$0xff]
    %v2011 = vld [vmem:[#allocation10 + $0x138] sm:$0xff]
    %v2012 = vld [vmem:[#allocation10 + $0x140] sm:$0xff]
    %v2013 = vld [vmem:[#allocation10 + $0x148] sm:$0xff]
    %v2014 = vld [vmem:[#allocation10 + $0x150] sm:$0xff]
    %v2015 = vld [vmem:[#allocation10 + $0x158] sm:$0xff]
    %v2016 = vld [vmem:[#allocation10 + $0x160] sm:$0xff]
    %v2017 = vld [vmem:[#allocation10 + $0x168] sm:$0xff]
    %v2018 = vld [vmem:[#allocation10 + $0x170] sm:$0xff]
    %v2019 = vld [vmem:[#allocation10 + $0x178] sm:$0xff]
    %v2020 = vld [vmem:[#allocation11] sm:$0x7]
    %v2022 = vlaneseq
    %v2023 = vshrl.u32 %v2022, 7
    %v2024 = vsub.s32 0, %v2023
    %v2025 = vrot.slane %v2020, %v2024
    %v2026 = vlaneseq
    %v2027 = vshrl.u32 %v2026, 7
    %v2028 = vsub.s32 1, %v2027
    %v2029 = vrot.slane %v2020, %v2028
    %v2030 = vlaneseq
    %v2031 = vshrl.u32 %v2030, 7
    %v2032 = vsub.s32 2, %v2031
    %v2033 = vrot.slane %v2020, %v2032
    %2037 = vmatprep.subr.mxu0 %v2018
    %2038 = vmatpush1.msra.mxu0 %v2017
    %2039 = vmatprep.subr.mxu0 %v2015
    %2040 = vmatpush1.msra.mxu0 %v2014
    %2041 = vmatprep.subr.mxu0 %v2012
    %2042 = vmatpush1.msra.mxu0 %v2011
    %2043 = vmatprep.subr.mxu0 %v2009
    %2044 = vmatpush1.msra.mxu0 %v2008
    %2045 = vmatprep.subr.mxu0 %v2006
    %2046 = vmatpush1.msra.mxu0 %v2005
    %2047 = vmatprep.subr.mxu0 %v2003
    %2048 = vmatpush1.msra.mxu0 %v2002
    %2049 = vmatprep.subr.mxu0 %v2000
    %2050 = vmatpush1.msra.mxu0 %v1999
    %2051 = vmatprep.subr.mxu0 %v1997
    %2052 = vmatpush1.msra.mxu0 %v1996
    %2053 = vmatprep.subr.mxu0 %v1994
    %2054 = vmatpush1.msra.mxu0 %v1993
    %2055 = vmatprep.subr.mxu0 %v1991
    %2056 = vmatpush1.msra.mxu0 %v1990
    %2057 = vmatprep.subr.mxu0 %v1988
    %2058 = vmatpush1.msra.mxu0 %v1987
    %2059 = vmatprep.subr.mxu0 %v1985
    %2060 = vmatpush1.msra.mxu0 %v1984
    %2061 = vmatprep.subr.mxu0 %v1982
    %2062 = vmatpush1.msra.mxu0 %v1981
    %2063 = vmatprep.subr.mxu0 %v1979
    %2064 = vmatpush1.msra.mxu0 %v1978
    %2065 = vmatprep.subr.mxu0 %v1976
    %2066 = vmatpush1.msra.mxu0 %v1975
    %2067 = vmatprep.subr.mxu0 %v1973
    %2068 = vmatpush1.msra.mxu0 %v1972
    %2069 = vmatprep.subr.mxu0 0.0
    %2070 = vmatpush2.msra.mxu0 0.0
    %2071 = vmatprep.subr.mxu0 0.0
    %2072 = vmatpush2.msra.mxu0 0.0
    %2073 = vmatprep.subr.mxu0 0.0
    %2074 = vmatpush2.msra.mxu0 0.0
    %2075 = vmatprep.subr.mxu0 0.0
    %2076 = vmatpush2.msra.mxu0 0.0
    %2077 = vmatprep.subr.mxu0 0.0
    %2078 = vmatpush2.msra.mxu0 0.0
    %2079 = vmatprep.subr.mxu0 0.0
    %2080 = vmatpush2.msra.mxu0 0.0
    %2081 = vmatprep.subr.mxu0 0.0
    %2082 = vmatpush2.msra.mxu0 0.0
    %2083 = vmatprep.subr.mxu0 0.0
    %2084 = vmatpush2.msra.mxu0 0.0
    %2085 = vmatprep.subr.mxu0 0.0
    %2086 = vmatpush2.msra.mxu0 0.0
    %2087 = vmatprep.subr.mxu0 0.0
    %2088 = vmatpush2.msra.mxu0 0.0
    %2089 = vmatprep.subr.mxu0 0.0
    %2090 = vmatpush2.msra.mxu0 0.0
    %2091 = vmatprep.subr.mxu0 0.0
    %2092 = vmatpush2.msra.mxu0 0.0
    %2093 = vmatprep.subr.mxu0 0.0
    %2094 = vmatpush2.msra.mxu0 0.0
    %2095 = vmatprep.subr.mxu0 0.0
    %2096 = vmatpush2.msra.mxu0 0.0
    %2097 = vmatprep.subr.mxu0 0.0
    %2098 = vmatpush2.msra.mxu0 0.0
    %2099 = vmatprep.subr.mxu0 0.0
    %2100 = vmatpush2.msra.mxu0 0.0
    %2101 = vmatprep.mubr.f32.mxu0 0.0
    %2102 = vmatmul.mubr.f32.gmra.mxu0 %v1968
    %v2103 = vpop.f32.mrf.mxu0
    %v2104 = vadd.f32 %v2025, %v2103
    %v2105 = vpop.f32.mrf.mxu0
    %v2106 = vadd.f32 %v2029, %v2105
    %2107 = vdwg.mxu0
    %2108 = vmatprep.subr.mxu0 0.0
    %2109 = vmatpush1.msra.mxu0 %v2019
    %2110 = vmatprep.subr.mxu0 0.0
    %2111 = vmatpush1.msra.mxu0 %v2016
    %2112 = vmatprep.subr.mxu0 0.0
    %2113 = vmatpush1.msra.mxu0 %v2013
    %2114 = vmatprep.subr.mxu0 0.0
    %2115 = vmatpush1.msra.mxu0 %v2010
    %2116 = vmatprep.subr.mxu0 0.0
    %2117 = vmatpush1.msra.mxu0 %v2007
    %2118 = vmatprep.subr.mxu0 0.0
    %2119 = vmatpush1.msra.mxu0 %v2004
    %2120 = vmatprep.subr.mxu0 0.0
    %2121 = vmatpush1.msra.mxu0 %v2001
    %2122 = vmatprep.subr.mxu0 0.0
    %2123 = vmatpush1.msra.mxu0 %v1998
    %2124 = vmatprep.subr.mxu0 0.0
    %2125 = vmatpush1.msra.mxu0 %v1995
    %2126 = vmatprep.subr.mxu0 0.0
    %2127 = vmatpush1.msra.mxu0 %v1992
    %2128 = vmatprep.subr.mxu0 0.0
    %2129 = vmatpush1.msra.mxu0 %v1989
    %2130 = vmatprep.subr.mxu0 0.0
    %2131 = vmatpush1.msra.mxu0 %v1986
    %2132 = vmatprep.subr.mxu0 0.0
    %2133 = vmatpush1.msra.mxu0 %v1983
    %2134 = vmatprep.subr.mxu0 0.0
    %2135 = vmatpush1.msra.mxu0 %v1980
    %2136 = vmatprep.subr.mxu0 0.0
    %2137 = vmatpush1.msra.mxu0 %v1977
    %2138 = vmatprep.subr.mxu0 0.0
    %2139 = vmatpush1.msra.mxu0 %v1974
    %2140 = vmatprep.subr.mxu0 0.0
    %2141 = vmatpush2.msra.mxu0 0.0
    %2142 = vmatprep.subr.mxu0 0.0
    %2143 = vmatpush2.msra.mxu0 0.0
    %2144 = vmatprep.subr.mxu0 0.0
    %2145 = vmatpush2.msra.mxu0 0.0
    %2146 = vmatprep.subr.mxu0 0.0
    %2147 = vmatpush2.msra.mxu0 0.0
    %2148 = vmatprep.subr.mxu0 0.0
    %2149 = vmatpush2.msra.mxu0 0.0
    %2150 = vmatprep.subr.mxu0 0.0
    %2151 = vmatpush2.msra.mxu0 0.0
    %2152 = vmatprep.subr.mxu0 0.0
    %2153 = vmatpush2.msra.mxu0 0.0
    %2154 = vmatprep.subr.mxu0 0.0
    %2155 = vmatpush2.msra.mxu0 0.0
    %2156 = vmatprep.subr.mxu0 0.0
    %2157 = vmatpush2.msra.mxu0 0.0
    %2158 = vmatprep.subr.mxu0 0.0
    %2159 = vmatpush2.msra.mxu0 0.0
    %2160 = vmatprep.subr.mxu0 0.0
    %2161 = vmatpush2.msra.mxu0 0.0
    %2162 = vmatprep.subr.mxu0 0.0
    %2163 = vmatpush2.msra.mxu0 0.0
    %2164 = vmatprep.subr.mxu0 0.0
    %2165 = vmatpush2.msra.mxu0 0.0
    %2166 = vmatprep.subr.mxu0 0.0
    %2167 = vmatpush2.msra.mxu0 0.0
    %2168 = vmatprep.subr.mxu0 0.0
    %2169 = vmatpush2.msra.mxu0 0.0
    %2170 = vmatprep.subr.mxu0 0.0
    %2171 = vmatpush2.msra.mxu0 0.0
    %2172 = vmatprep.mubr.f32.mxu0 0.0
    %2173 = vmatmul.mubr.f32.gmra.mxu0 %v1968
    %v2174 = vpop.f32.mrf.mxu0
    %v2175 = vadd.f32 %v2033, %v2174
    %v2176 = vpop.f32.mrf.mxu0
    %2177 = vdwg.mxu0
    %v2178 = vadd.f32 %v1971, %v2104
    %v2179 = vxor.u32 %v2178, 2147483648
    %v2180 = vmul.f32 %v2179, 1.442695
    %v2181 = vpow.pop %v2180
    %v2182 = vadd.f32 %v2181, 1.0
    %v2183 = vrcp.pop %v2182
    %v2184 = vmul.f32 1.0, %v2183
    %v2186 = vrot.slane %v1971, 1
    %v2188 = vadd.f32 %v2186, %v2106
    %v2189 = vxor.u32 %v2188, 2147483648
    %v2190 = vmul.f32 %v2189, 1.442695
    %v2191 = vpow.pop %v2190
    %v2192 = vadd.f32 %v2191, 1.0
    %v2193 = vrcp.pop %v2192
    %v2194 = vmul.f32 1.0, %v2193
    %v2195 = vmul.f32 %v2184, %v2175
    %v2196 = vrot.slane %v1971, 2
    %v2198 = vadd.f32 %v2196, %v2195
    %v2199 = vtanh.pop %v2198
    %v2200 = vsub.f32 1.0, %v2194
    %v2201 = vmul.f32 %v2200, %v2199
    %v2202 = vmul.f32 %v2194, %v1968
    %v2203 = vadd.f32 %v2201, %v2202
    %2204 = vst [vmem:[%s7 + $0x7] sm:$0x1] %v2203
    // Predicated region
    $region42: #{encode_sequence.1} parent=1 // pred_check
      _
    $region43: #{encode_sequence.1} parent=1 // pred_check_branch
      %2206 = sbr.rel (0) target = $region45
    $region44: #{encode_sequence.1} parent=1 // pred_region
      _
    $region45: #{encode_sequence.1} parent=1 // pred_fallthru
      _
    // Predicated region
    $region46: #{encode_sequence.1} parent=1 // pred_check
      _
    $region47: #{encode_sequence.1} parent=1 // pred_check_branch
      %2208 = sbr.rel (0) target = $region49
    $region48: #{encode_sequence.1} parent=1 // pred_region
      _
    $region49: #{encode_sequence.1} parent=1 // pred_fallthru
      _
    %2209 = vsyncpa [#allocation7], 1
    %2210 = vsyncpa [#allocation9], 1
    %2211 = vsyncpa [#allocation12], 1

</llo_original>
